<compile_context>
chip_gen: v7x
topology: tpu7x:2x2x1
jax: 0.10.0
libtpu: 0.0.40
codegen_flags: <defaults>
</compile_context>

<pallas_src>
import jax
import jax.numpy as jnp
from jax.experimental import pallas as pl
from jax.experimental.pallas import tpu as pltpu

H = 32      # hidden size (encoder.hidden_size == decoder.hidden_size)
F_IN = 2    # feature size (x, y coordinates)
OUT_LANES = 128  # lane-dense padded width of the output head


def _gates_to_hc(gates, c):
    """gates: [B, 4H] pre-activation (i|f|g|o) whose g lanes (2H:3H) were
    pre-scaled by 2 via the weight/bias prep.  ONE full-width sigmoid gives
    i, f, o directly and tanh(g_raw) = 2*sigmoid(2*g_raw) - 1 = 2*sig - 1.
    tanh(c_new) uses the same identity (one [B,H] sigmoid, no tanh pushes)."""
    sig = jax.nn.sigmoid(gates)
    i = sig[:, 0 * H:1 * H]
    f = sig[:, 1 * H:2 * H]
    g = 2.0 * sig[:, 2 * H:3 * H] - 1.0
    o = sig[:, 3 * H:4 * H]
    c_new = f * c + i * g
    h_new = o * (2.0 * jax.nn.sigmoid(2.0 * c_new) - 1.0)
    return h_new, c_new


def _make_kernel(T_obs, T_tgt, B_pad):
    def kernel(x_ref,                                   # [T_obs*B_pad, F]  f32
               wihe_ref, be_ref,                        # f32 (g-scaled)
               whhe_ref,                                # bf16 (g-scaled)
               wihd_ref, whhd_ref,                      # bf16 (g-scaled)
               bd_ref,                                  # f32 (g-scaled)
               wfused_ref, bfused_ref,                  # bf16 / f32
               wout_ref, bout_ref,                      # f32, lane-padded
               out_ref,                                 # [T_tgt*B_pad, 128]
               xp_sc,                                   # [T_obs*B_pad, 4H]
               hh_sc):                                  # [T_tgt*B_pad, H]
        bf16 = jnp.bfloat16

        # ---- hoist loop-invariant weights into vregs once ----
        whhe = whhe_ref[...]
        wihd = wihd_ref[...]
        whhd = whhd_ref[...]
        wfused = wfused_ref[...]
        bd = bd_ref[...]
        bfused = jnp.broadcast_to(bfused_ref[...], (B_pad, 4 * H))

        # ---- encoder input projection: ALL timesteps in one MXU matmul ----
        xp_sc[...] = (jnp.dot(x_ref[...], wihe_ref[...],
                              preferred_element_type=jnp.float32)
                      + be_ref[...])

        h = jnp.zeros((B_pad, H), jnp.float32)
        c = jnp.zeros((B_pad, H), jnp.float32)

        # ---- encoder recurrence: one bf16 h @ W_hh matmul per step ----
        for t in range(T_obs):
            gates = (xp_sc[pl.ds(t * B_pad, B_pad), :]
                     + jnp.dot(h.astype(bf16), whhe,
                               preferred_element_type=jnp.float32))
            h, c = _gates_to_hc(gates, c)

        # ---- decoder step 0: input = x[-1, :, :] ----
        x_last = x_ref[pl.ds((T_obs - 1) * B_pad, B_pad), :].astype(bf16)
        gates = (jnp.dot(x_last, wihd, preferred_element_type=jnp.float32)
                 + jnp.dot(h.astype(bf16), whhd,
                           preferred_element_type=jnp.float32)
                 + bd)
        h, c = _gates_to_hc(gates, c)
        hh_sc[pl.ds(0, B_pad), :] = h

        # ---- decoder steps >= 1: output head folded into the recurrence ----
        # inp_t = h_{t-1} @ W_out + b_out  =>  one matmul per step with
        # W_fused / b_fused (precomputed in the wrapper).
        for t in range(1, T_tgt):
            gates = (jnp.dot(h.astype(bf16), wfused,
                             preferred_element_type=jnp.float32)
                     + bfused)
            h, c = _gates_to_hc(gates, c)
            hh_sc[pl.ds(t * B_pad, B_pad), :] = h

        # ---- output head: one batched matmul + one lane-dense bulk store ----
        out_ref[...] = (jnp.dot(hh_sc[...], wout_ref[...],
                                preferred_element_type=jnp.float32)
                        + bout_ref[...])

        # TODO(synk): stochastic teacher forcing (host-side random.random())
        # has no in-kernel equivalent; teaching_force = 0.0 here, so the
        # prediction is always fed back (deterministic autoregressive path).

    return kernel


def trajseq_forward(x, y, params):
    """x: [T_obs, B, F], y: [T_tgt, B, F] (shape-only; teaching_force = 0.0).
    Returns outputs: [T_tgt, B, F]."""
    T_obs, B, F = x.shape
    T_tgt = y.shape[0]
    B_pad = ((B + 7) // 8) * 8                       # sublane-align the batch

    wihe, whhe, be, wihd, whhd, bd, wout, bout = params

    # ---- g-gate pre-scaling: multiply lanes [2H:3H] by 2 (exact) ----------
    def scale_g(w):
        return w.at[..., 2 * H:3 * H].multiply(2.0)

    wihe_s, whhe_s, be_s = scale_g(wihe), scale_g(whhe), scale_g(be)
    wihd_s, whhd_s, bd_s = scale_g(wihd), scale_g(whhd), scale_g(bd)

    # ---- fold the output head into the decoder recurrence (steps >= 1) ----
    w_fused = whhd_s + wout @ wihd_s                 # [H, 4H]
    b_fused = bd_s + bout @ wihd_s                   # [1, 4H]

    # ---- lane-dense output head: pad W_out / b_out to 128 lanes -----------
    wout_pad = jnp.zeros((H, OUT_LANES), jnp.float32).at[:, :F].set(wout)
    bout_pad = jnp.zeros((1, OUT_LANES), jnp.float32).at[:, :F].set(bout)

    # ---- bf16 critical-path MXU operands (f32 accumulation in-kernel) -----
    bf16 = jnp.bfloat16
    whhe_bf = whhe_s.astype(bf16)
    wihd_bf = wihd_s.astype(bf16)
    whhd_bf = whhd_s.astype(bf16)
    wfused_bf = w_fused.astype(bf16)

    x_p = jnp.zeros((T_obs, B_pad, F), jnp.float32).at[:, :B, :].set(x)
    x_flat = x_p.reshape(T_obs * B_pad, F)           # wrapper-side layout plumbing

    vmem = pl.BlockSpec(memory_space=pltpu.MemorySpace.VMEM)
    kernel = _make_kernel(T_obs, T_tgt, B_pad)

    out_flat = pl.pallas_call(
        kernel,
        out_shape=jax.ShapeDtypeStruct((T_tgt * B_pad, OUT_LANES), jnp.float32),
        in_specs=[vmem] * 11,
        out_specs=vmem,
        scratch_shapes=[
            pltpu.VMEM((T_obs * B_pad, 4 * H), jnp.float32),  # x projection
            pltpu.VMEM((T_tgt * B_pad, H), jnp.float32),      # h history
        ],
    )(x_flat, wihe_s, be_s, whhe_bf, wihd_bf, whhd_bf, bd_s,
      wfused_bf, b_fused, wout_pad, bout_pad)

    out = out_flat[:, :F].reshape(T_tgt, B_pad, F)
    return out[:, :B, :]


def trajseq_reference(x, y, params):
    """Pure-JAX reference of the same forward pass (teaching_force = 0.0),
    using the straightforward (unfused, f32, real tanh) per-step math."""
    wihe, whhe, be, wihd, whhd, bd, wout, bout = params
    T_tgt, B, F = y.shape

    def step(x_t, h, c, wih, whh, b):
        gates = x_t @ wih + h @ whh + b
        i = jax.nn.sigmoid(gates[:, 0 * H:1 * H])
        f = jax.nn.sigmoid(gates[:, 1 * H:2 * H])
        g = jnp.tanh(gates[:, 2 * H:3 * H])
        o = jax.nn.sigmoid(gates[:, 3 * H:4 * H])
        c_new = f * c + i * g
        h_new = o * jnp.tanh(c_new)
        return h_new, c_new

    h = jnp.zeros((B, H), jnp.float32)
    c = jnp.zeros((B, H), jnp.float32)
    for t in range(x.shape[0]):
        h, c = step(x[t], h, c, wihe, whhe, be)
    inp = x[-1]
    outs = []
    for _ in range(T_tgt):
        h, c = step(inp, h, c, wihd, whhd, bd)
        o = h @ wout + bout
        outs.append(o)
        inp = o
    return jnp.stack(outs, axis=0)


def make_params(key):
    ks = jax.random.split(key, 8)
    s = 0.1
    w_ih_enc = s * jax.random.normal(ks[0], (F_IN, 4 * H), jnp.float32)
    w_hh_enc = s * jax.random.normal(ks[1], (H, 4 * H), jnp.float32)
    b_enc    = s * jax.random.normal(ks[2], (1, 4 * H), jnp.float32)
    w_ih_dec = s * jax.random.normal(ks[3], (F_IN, 4 * H), jnp.float32)
    w_hh_dec = s * jax.random.normal(ks[4], (H, 4 * H), jnp.float32)
    b_dec    = s * jax.random.normal(ks[5], (1, 4 * H), jnp.float32)
    w_out    = s * jax.random.normal(ks[6], (H, F_IN), jnp.float32)
    b_out    = s * jax.random.normal(ks[7], (1, F_IN), jnp.float32)
    return (w_ih_enc, w_hh_enc, b_enc,
            w_ih_dec, w_hh_dec, b_dec,
            w_out, b_out)


if __name__ == "__main__":
    key = jax.random.PRNGKey(0)
    k_x, k_y, k_p = jax.random.split(key, 3)

    T_OBS, T_TGT, B = 8, 6, 4      # small stand-ins for (20, 30, batch)
    x = jax.random.normal(k_x, (T_OBS, B, F_IN), jnp.float32)
    y = jax.random.normal(k_y, (T_TGT, B, F_IN), jnp.float32)
    params = make_params(k_p)

    out = trajseq_forward(x, y, params)
    out = jax.block_until_ready(out)

    ref = trajseq_reference(x, y, params)
    assert out.shape == (T_TGT, B, F_IN)
    # Tolerance loosened (vs 1e-4) for bf16 MXU operands on the recurrence
    # and the 2*sigmoid(2x)-1 tanh rewrite, per the perf review.
    assert jnp.allclose(out, ref, atol=2e-2, rtol=2e-2), "mismatch vs reference"

    print("KERNEL_OK")
</pallas_src>

<mosaic_0001>
module attributes {stable_mosaic.version = 11 : i64} {
  func.func @kernel(%arg0: memref<64x2xf32, #tpu.memory_space<vmem>>, %arg1: memref<2x128xf32, #tpu.memory_space<vmem>>, %arg2: memref<1x128xf32, #tpu.memory_space<vmem>>, %arg3: memref<32x128xbf16, #tpu.memory_space<vmem>>, %arg4: memref<2x128xbf16, #tpu.memory_space<vmem>>, %arg5: memref<32x128xbf16, #tpu.memory_space<vmem>>, %arg6: memref<1x128xf32, #tpu.memory_space<vmem>>, %arg7: memref<32x128xbf16, #tpu.memory_space<vmem>>, %arg8: memref<1x128xf32, #tpu.memory_space<vmem>>, %arg9: memref<32x128xf32, #tpu.memory_space<vmem>>, %arg10: memref<1x128xf32, #tpu.memory_space<vmem>>, %arg11: memref<48x128xf32, #tpu.memory_space<vmem>>, %arg12: memref<64x128xf32, #tpu.memory_space<vmem>>, %arg13: memref<48x32xf32, #tpu.memory_space<vmem>>) attributes {dimension_semantics = [], scalar_prefetch = 0 : i64, scratch_operands = 2 : i64, tpu.core_type = #tpu.core_type<tc>} {
    %c0 = arith.constant 0 : index
    %c0_0 = arith.constant 0 : index
    %0 = vector.load %arg3[%c0, %c0_0] : memref<32x128xbf16, #tpu.memory_space<vmem>>, vector<32x128xbf16>
    %c0_1 = arith.constant 0 : index
    %c0_2 = arith.constant 0 : index
    %1 = vector.load %arg4[%c0_1, %c0_2] : memref<2x128xbf16, #tpu.memory_space<vmem>>, vector<2x128xbf16>
    %c0_3 = arith.constant 0 : index
    %c0_4 = arith.constant 0 : index
    %2 = vector.load %arg5[%c0_3, %c0_4] : memref<32x128xbf16, #tpu.memory_space<vmem>>, vector<32x128xbf16>
    %c0_5 = arith.constant 0 : index
    %c0_6 = arith.constant 0 : index
    %3 = vector.load %arg7[%c0_5, %c0_6] : memref<32x128xbf16, #tpu.memory_space<vmem>>, vector<32x128xbf16>
    %c0_7 = arith.constant 0 : index
    %c0_8 = arith.constant 0 : index
    %4 = vector.load %arg6[%c0_7, %c0_8] : memref<1x128xf32, #tpu.memory_space<vmem>>, vector<1x128xf32>
    %c0_9 = arith.constant 0 : index
    %c0_10 = arith.constant 0 : index
    %5 = vector.load %arg8[%c0_9, %c0_10] : memref<1x128xf32, #tpu.memory_space<vmem>>, vector<1x128xf32>
    %6 = vector.shape_cast %5 : vector<1x128xf32> to vector<1x128xf32>
    %7 = vector.broadcast %6 : vector<1x128xf32> to vector<8x128xf32>
    %c0_11 = arith.constant 0 : index
    %c0_12 = arith.constant 0 : index
    %8 = vector.load %arg0[%c0_11, %c0_12] : memref<64x2xf32, #tpu.memory_space<vmem>>, vector<64x2xf32>
    %c0_13 = arith.constant 0 : index
    %c0_14 = arith.constant 0 : index
    %9 = vector.load %arg1[%c0_13, %c0_14] : memref<2x128xf32, #tpu.memory_space<vmem>>, vector<2x128xf32>
    %cst = arith.constant dense<0.000000e+00> : vector<64x128xf32>
    %10 = tpu.matmul %8, %9, %cst {dimension_numbers = #tpu.dot_dimension_numbers<[1], [0], [0], [1], [0, 0, 1, 1], [], []>} : vector<64x2xf32>, vector<2x128xf32>, vector<64x128xf32> -> vector<64x128xf32>
    %c0_15 = arith.constant 0 : index
    %c0_16 = arith.constant 0 : index
    %11 = vector.load %arg2[%c0_15, %c0_16] : memref<1x128xf32, #tpu.memory_space<vmem>>, vector<1x128xf32>
    %12 = vector.broadcast %11 : vector<1x128xf32> to vector<64x128xf32>
    %13 = arith.addf %10, %12 : vector<64x128xf32>
    %c0_17 = arith.constant 0 : index
    %c0_18 = arith.constant 0 : index
    %14 = vector.load %arg12[%c0_17, %c0_18] : memref<64x128xf32, #tpu.memory_space<vmem>>, vector<64x128xf32>
    tpu.vector_store %arg12[%c0_17, %c0_18], %13 {strides = array<i32>} : memref<64x128xf32, #tpu.memory_space<vmem>>, vector<64x128xf32>,
    %cst_19 = arith.constant 0.000000e+00 : f32
    %15 = vector.broadcast %cst_19 : f32 to vector<8x32xf32>
    %cst_20 = arith.constant 0.000000e+00 : f32
    %16 = vector.broadcast %cst_20 : f32 to vector<8x32xf32>
    %c0_21 = arith.constant 0 : index
    %c0_22 = arith.constant 0 : index
    %17 = vector.load %arg12[%c0_21, %c0_22] : memref<64x128xf32, #tpu.memory_space<vmem>>, vector<8x128xf32>
    %18 = arith.truncf %15 : vector<8x32xf32> to vector<8x32xbf16>
    %cst_23 = arith.constant dense<0.000000e+00> : vector<8x128xf32>
    %19 = tpu.matmul %18, %0, %cst_23 {dimension_numbers = #tpu.dot_dimension_numbers<[1], [0], [0], [1], [0, 0, 1, 1], [], []>} : vector<8x32xbf16>, vector<32x128xbf16>, vector<8x128xf32> -> vector<8x128xf32>
    %20 = arith.addf %17, %19 : vector<8x128xf32>
    %21 = arith.negf %20 : vector<8x128xf32>
    %22 = math.exp %21 : vector<8x128xf32>
    %cst_24 = arith.constant 1.000000e+00 : f32
    %23 = vector.broadcast %cst_24 : f32 to vector<8x128xf32>
    %24 = arith.addf %23, %22 : vector<8x128xf32>
    %25 = arith.divf %23, %24 : vector<8x128xf32>
    %26 = vector.extract_strided_slice %25 {offsets = [0, 0], sizes = [8, 32], strides = [1, 1]} : vector<8x128xf32> to vector<8x32xf32>
    %27 = vector.extract_strided_slice %25 {offsets = [0, 32], sizes = [8, 32], strides = [1, 1]} : vector<8x128xf32> to vector<8x32xf32>
    %28 = vector.extract_strided_slice %25 {offsets = [0, 64], sizes = [8, 32], strides = [1, 1]} : vector<8x128xf32> to vector<8x32xf32>
    %cst_25 = arith.constant 2.000000e+00 : f32
    %29 = vector.broadcast %cst_25 : f32 to vector<8x32xf32>
    %30 = arith.mulf %29, %28 : vector<8x32xf32>
    %cst_26 = arith.constant 1.000000e+00 : f32
    %31 = vector.broadcast %cst_26 : f32 to vector<8x32xf32>
    %32 = arith.subf %30, %31 : vector<8x32xf32>
    %33 = vector.extract_strided_slice %25 {offsets = [0, 96], sizes = [8, 32], strides = [1, 1]} : vector<8x128xf32> to vector<8x32xf32>
    %34 = arith.mulf %27, %16 : vector<8x32xf32>
    %35 = arith.mulf %26, %32 : vector<8x32xf32>
    %36 = arith.addf %34, %35 : vector<8x32xf32>
    %cst_27 = arith.constant 2.000000e+00 : f32
    %37 = vector.broadcast %cst_27 : f32 to vector<8x32xf32>
    %38 = arith.mulf %37, %36 : vector<8x32xf32>
    %39 = arith.negf %38 : vector<8x32xf32>
    %40 = math.exp %39 : vector<8x32xf32>
    %cst_28 = arith.constant 1.000000e+00 : f32
    %41 = vector.broadcast %cst_28 : f32 to vector<8x32xf32>
    %42 = arith.addf %41, %40 : vector<8x32xf32>
    %43 = arith.divf %41, %42 : vector<8x32xf32>
    %cst_29 = arith.constant 2.000000e+00 : f32
    %44 = vector.broadcast %cst_29 : f32 to vector<8x32xf32>
    %45 = arith.mulf %44, %43 : vector<8x32xf32>
    %cst_30 = arith.constant 1.000000e+00 : f32
    %46 = vector.broadcast %cst_30 : f32 to vector<8x32xf32>
    %47 = arith.subf %45, %46 : vector<8x32xf32>
    %48 = arith.mulf %33, %47 : vector<8x32xf32>
    %c8 = arith.constant 8 : index
    %c0_31 = arith.constant 0 : index
    %49 = vector.load %arg12[%c8, %c0_31] : memref<64x128xf32, #tpu.memory_space<vmem>>, vector<8x128xf32>
    %50 = arith.truncf %48 : vector<8x32xf32> to vector<8x32xbf16>
    %cst_32 = arith.constant dense<0.000000e+00> : vector<8x128xf32>
    %51 = tpu.matmul %50, %0, %cst_32 {dimension_numbers = #tpu.dot_dimension_numbers<[1], [0], [0], [1], [0, 0, 1, 1], [], []>} : vector<8x32xbf16>, vector<32x128xbf16>, vector<8x128xf32> -> vector<8x128xf32>
    %52 = arith.addf %49, %51 : vector<8x128xf32>
    %53 = arith.negf %52 : vector<8x128xf32>
    %54 = math.exp %53 : vector<8x128xf32>
    %cst_33 = arith.constant 1.000000e+00 : f32
    %55 = vector.broadcast %cst_33 : f32 to vector<8x128xf32>
    %56 = arith.addf %55, %54 : vector<8x128xf32>
    %57 = arith.divf %55, %56 : vector<8x128xf32>
    %58 = vector.extract_strided_slice %57 {offsets = [0, 0], sizes = [8, 32], strides = [1, 1]} : vector<8x128xf32> to vector<8x32xf32>
    %59 = vector.extract_strided_slice %57 {offsets = [0, 32], sizes = [8, 32], strides = [1, 1]} : vector<8x128xf32> to vector<8x32xf32>
    %60 = vector.extract_strided_slice %57 {offsets = [0, 64], sizes = [8, 32], strides = [1, 1]} : vector<8x128xf32> to vector<8x32xf32>
    %cst_34 = arith.constant 2.000000e+00 : f32
    %61 = vector.broadcast %cst_34 : f32 to vector<8x32xf32>
    %62 = arith.mulf %61, %60 : vector<8x32xf32>
    %cst_35 = arith.constant 1.000000e+00 : f32
    %63 = vector.broadcast %cst_35 : f32 to vector<8x32xf32>
    %64 = arith.subf %62, %63 : vector<8x32xf32>
    %65 = vector.extract_strided_slice %57 {offsets = [0, 96], sizes = [8, 32], strides = [1, 1]} : vector<8x128xf32> to vector<8x32xf32>
    %66 = arith.mulf %59, %36 : vector<8x32xf32>
    %67 = arith.mulf %58, %64 : vector<8x32xf32>
    %68 = arith.addf %66, %67 : vector<8x32xf32>
    %cst_36 = arith.constant 2.000000e+00 : f32
    %69 = vector.broadcast %cst_36 : f32 to vector<8x32xf32>
    %70 = arith.mulf %69, %68 : vector<8x32xf32>
    %71 = arith.negf %70 : vector<8x32xf32>
    %72 = math.exp %71 : vector<8x32xf32>
    %cst_37 = arith.constant 1.000000e+00 : f32
    %73 = vector.broadcast %cst_37 : f32 to vector<8x32xf32>
    %74 = arith.addf %73, %72 : vector<8x32xf32>
    %75 = arith.divf %73, %74 : vector<8x32xf32>
    %cst_38 = arith.constant 2.000000e+00 : f32
    %76 = vector.broadcast %cst_38 : f32 to vector<8x32xf32>
    %77 = arith.mulf %76, %75 : vector<8x32xf32>
    %cst_39 = arith.constant 1.000000e+00 : f32
    %78 = vector.broadcast %cst_39 : f32 to vector<8x32xf32>
    %79 = arith.subf %77, %78 : vector<8x32xf32>
    %80 = arith.mulf %65, %79 : vector<8x32xf32>
    %c16 = arith.constant 16 : index
    %c0_40 = arith.constant 0 : index
    %81 = vector.load %arg12[%c16, %c0_40] : memref<64x128xf32, #tpu.memory_space<vmem>>, vector<8x128xf32>
    %82 = arith.truncf %80 : vector<8x32xf32> to vector<8x32xbf16>
    %cst_41 = arith.constant dense<0.000000e+00> : vector<8x128xf32>
    %83 = tpu.matmul %82, %0, %cst_41 {dimension_numbers = #tpu.dot_dimension_numbers<[1], [0], [0], [1], [0, 0, 1, 1], [], []>} : vector<8x32xbf16>, vector<32x128xbf16>, vector<8x128xf32> -> vector<8x128xf32>
    %84 = arith.addf %81, %83 : vector<8x128xf32>
    %85 = arith.negf %84 : vector<8x128xf32>
    %86 = math.exp %85 : vector<8x128xf32>
    %cst_42 = arith.constant 1.000000e+00 : f32
    %87 = vector.broadcast %cst_42 : f32 to vector<8x128xf32>
    %88 = arith.addf %87, %86 : vector<8x128xf32>
    %89 = arith.divf %87, %88 : vector<8x128xf32>
    %90 = vector.extract_strided_slice %89 {offsets = [0, 0], sizes = [8, 32], strides = [1, 1]} : vector<8x128xf32> to vector<8x32xf32>
    %91 = vector.extract_strided_slice %89 {offsets = [0, 32], sizes = [8, 32], strides = [1, 1]} : vector<8x128xf32> to vector<8x32xf32>
    %92 = vector.extract_strided_slice %89 {offsets = [0, 64], sizes = [8, 32], strides = [1, 1]} : vector<8x128xf32> to vector<8x32xf32>
    %cst_43 = arith.constant 2.000000e+00 : f32
    %93 = vector.broadcast %cst_43 : f32 to vector<8x32xf32>
    %94 = arith.mulf %93, %92 : vector<8x32xf32>
    %cst_44 = arith.constant 1.000000e+00 : f32
    %95 = vector.broadcast %cst_44 : f32 to vector<8x32xf32>
    %96 = arith.subf %94, %95 : vector<8x32xf32>
    %97 = vector.extract_strided_slice %89 {offsets = [0, 96], sizes = [8, 32], strides = [1, 1]} : vector<8x128xf32> to vector<8x32xf32>
    %98 = arith.mulf %91, %68 : vector<8x32xf32>
    %99 = arith.mulf %90, %96 : vector<8x32xf32>
    %100 = arith.addf %98, %99 : vector<8x32xf32>
    %cst_45 = arith.constant 2.000000e+00 : f32
    %101 = vector.broadcast %cst_45 : f32 to vector<8x32xf32>
    %102 = arith.mulf %101, %100 : vector<8x32xf32>
    %103 = arith.negf %102 : vector<8x32xf32>
    %104 = math.exp %103 : vector<8x32xf32>
    %cst_46 = arith.constant 1.000000e+00 : f32
    %105 = vector.broadcast %cst_46 : f32 to vector<8x32xf32>
    %106 = arith.addf %105, %104 : vector<8x32xf32>
    %107 = arith.divf %105, %106 : vector<8x32xf32>
    %cst_47 = arith.constant 2.000000e+00 : f32
    %108 = vector.broadcast %cst_47 : f32 to vector<8x32xf32>
    %109 = arith.mulf %108, %107 : vector<8x32xf32>
    %cst_48 = arith.constant 1.000000e+00 : f32
    %110 = vector.broadcast %cst_48 : f32 to vector<8x32xf32>
    %111 = arith.subf %109, %110 : vector<8x32xf32>
    %112 = arith.mulf %97, %111 : vector<8x32xf32>
    %c24 = arith.constant 24 : index
    %c0_49 = arith.constant 0 : index
    %113 = vector.load %arg12[%c24, %c0_49] : memref<64x128xf32, #tpu.memory_space<vmem>>, vector<8x128xf32>
    %114 = arith.truncf %112 : vector<8x32xf32> to vector<8x32xbf16>
    %cst_50 = arith.constant dense<0.000000e+00> : vector<8x128xf32>
    %115 = tpu.matmul %114, %0, %cst_50 {dimension_numbers = #tpu.dot_dimension_numbers<[1], [0], [0], [1], [0, 0, 1, 1], [], []>} : vector<8x32xbf16>, vector<32x128xbf16>, vector<8x128xf32> -> vector<8x128xf32>
    %116 = arith.addf %113, %115 : vector<8x128xf32>
    %117 = arith.negf %116 : vector<8x128xf32>
    %118 = math.exp %117 : vector<8x128xf32>
    %cst_51 = arith.constant 1.000000e+00 : f32
    %119 = vector.broadcast %cst_51 : f32 to vector<8x128xf32>
    %120 = arith.addf %119, %118 : vector<8x128xf32>
    %121 = arith.divf %119, %120 : vector<8x128xf32>
    %122 = vector.extract_strided_slice %121 {offsets = [0, 0], sizes = [8, 32], strides = [1, 1]} : vector<8x128xf32> to vector<8x32xf32>
    %123 = vector.extract_strided_slice %121 {offsets = [0, 32], sizes = [8, 32], strides = [1, 1]} : vector<8x128xf32> to vector<8x32xf32>
    %124 = vector.extract_strided_slice %121 {offsets = [0, 64], sizes = [8, 32], strides = [1, 1]} : vector<8x128xf32> to vector<8x32xf32>
    %cst_52 = arith.constant 2.000000e+00 : f32
    %125 = vector.broadcast %cst_52 : f32 to vector<8x32xf32>
    %126 = arith.mulf %125, %124 : vector<8x32xf32>
    %cst_53 = arith.constant 1.000000e+00 : f32
    %127 = vector.broadcast %cst_53 : f32 to vector<8x32xf32>
    %128 = arith.subf %126, %127 : vector<8x32xf32>
    %129 = vector.extract_strided_slice %121 {offsets = [0, 96], sizes = [8, 32], strides = [1, 1]} : vector<8x128xf32> to vector<8x32xf32>
    %130 = arith.mulf %123, %100 : vector<8x32xf32>
    %131 = arith.mulf %122, %128 : vector<8x32xf32>
    %132 = arith.addf %130, %131 : vector<8x32xf32>
    %cst_54 = arith.constant 2.000000e+00 : f32
    %133 = vector.broadcast %cst_54 : f32 to vector<8x32xf32>
    %134 = arith.mulf %133, %132 : vector<8x32xf32>
    %135 = arith.negf %134 : vector<8x32xf32>
    %136 = math.exp %135 : vector<8x32xf32>
    %cst_55 = arith.constant 1.000000e+00 : f32
    %137 = vector.broadcast %cst_55 : f32 to vector<8x32xf32>
    %138 = arith.addf %137, %136 : vector<8x32xf32>
    %139 = arith.divf %137, %138 : vector<8x32xf32>
    %cst_56 = arith.constant 2.000000e+00 : f32
    %140 = vector.broadcast %cst_56 : f32 to vector<8x32xf32>
    %141 = arith.mulf %140, %139 : vector<8x32xf32>
    %cst_57 = arith.constant 1.000000e+00 : f32
    %142 = vector.broadcast %cst_57 : f32 to vector<8x32xf32>
    %143 = arith.subf %141, %142 : vector<8x32xf32>
    %144 = arith.mulf %129, %143 : vector<8x32xf32>
    %c32 = arith.constant 32 : index
    %c0_58 = arith.constant 0 : index
    %145 = vector.load %arg12[%c32, %c0_58] : memref<64x128xf32, #tpu.memory_space<vmem>>, vector<8x128xf32>
    %146 = arith.truncf %144 : vector<8x32xf32> to vector<8x32xbf16>
    %cst_59 = arith.constant dense<0.000000e+00> : vector<8x128xf32>
    %147 = tpu.matmul %146, %0, %cst_59 {dimension_numbers = #tpu.dot_dimension_numbers<[1], [0], [0], [1], [0, 0, 1, 1], [], []>} : vector<8x32xbf16>, vector<32x128xbf16>, vector<8x128xf32> -> vector<8x128xf32>
    %148 = arith.addf %145, %147 : vector<8x128xf32>
    %149 = arith.negf %148 : vector<8x128xf32>
    %150 = math.exp %149 : vector<8x128xf32>
    %cst_60 = arith.constant 1.000000e+00 : f32
    %151 = vector.broadcast %cst_60 : f32 to vector<8x128xf32>
    %152 = arith.addf %151, %150 : vector<8x128xf32>
    %153 = arith.divf %151, %152 : vector<8x128xf32>
    %154 = vector.extract_strided_slice %153 {offsets = [0, 0], sizes = [8, 32], strides = [1, 1]} : vector<8x128xf32> to vector<8x32xf32>
    %155 = vector.extract_strided_slice %153 {offsets = [0, 32], sizes = [8, 32], strides = [1, 1]} : vector<8x128xf32> to vector<8x32xf32>
    %156 = vector.extract_strided_slice %153 {offsets = [0, 64], sizes = [8, 32], strides = [1, 1]} : vector<8x128xf32> to vector<8x32xf32>
    %cst_61 = arith.constant 2.000000e+00 : f32
    %157 = vector.broadcast %cst_61 : f32 to vector<8x32xf32>
    %158 = arith.mulf %157, %156 : vector<8x32xf32>
    %cst_62 = arith.constant 1.000000e+00 : f32
    %159 = vector.broadcast %cst_62 : f32 to vector<8x32xf32>
    %160 = arith.subf %158, %159 : vector<8x32xf32>
    %161 = vector.extract_strided_slice %153 {offsets = [0, 96], sizes = [8, 32], strides = [1, 1]} : vector<8x128xf32> to vector<8x32xf32>
    %162 = arith.mulf %155, %132 : vector<8x32xf32>
    %163 = arith.mulf %154, %160 : vector<8x32xf32>
    %164 = arith.addf %162, %163 : vector<8x32xf32>
    %cst_63 = arith.constant 2.000000e+00 : f32
    %165 = vector.broadcast %cst_63 : f32 to vector<8x32xf32>
    %166 = arith.mulf %165, %164 : vector<8x32xf32>
    %167 = arith.negf %166 : vector<8x32xf32>
    %168 = math.exp %167 : vector<8x32xf32>
    %cst_64 = arith.constant 1.000000e+00 : f32
    %169 = vector.broadcast %cst_64 : f32 to vector<8x32xf32>
    %170 = arith.addf %169, %168 : vector<8x32xf32>
    %171 = arith.divf %169, %170 : vector<8x32xf32>
    %cst_65 = arith.constant 2.000000e+00 : f32
    %172 = vector.broadcast %cst_65 : f32 to vector<8x32xf32>
    %173 = arith.mulf %172, %171 : vector<8x32xf32>
    %cst_66 = arith.constant 1.000000e+00 : f32
    %174 = vector.broadcast %cst_66 : f32 to vector<8x32xf32>
    %175 = arith.subf %173, %174 : vector<8x32xf32>
    %176 = arith.mulf %161, %175 : vector<8x32xf32>
    %c40 = arith.constant 40 : index
    %c0_67 = arith.constant 0 : index
    %177 = vector.load %arg12[%c40, %c0_67] : memref<64x128xf32, #tpu.memory_space<vmem>>, vector<8x128xf32>
    %178 = arith.truncf %176 : vector<8x32xf32> to vector<8x32xbf16>
    %cst_68 = arith.constant dense<0.000000e+00> : vector<8x128xf32>
    %179 = tpu.matmul %178, %0, %cst_68 {dimension_numbers = #tpu.dot_dimension_numbers<[1], [0], [0], [1], [0, 0, 1, 1], [], []>} : vector<8x32xbf16>, vector<32x128xbf16>, vector<8x128xf32> -> vector<8x128xf32>
    %180 = arith.addf %177, %179 : vector<8x128xf32>
    %181 = arith.negf %180 : vector<8x128xf32>
    %182 = math.exp %181 : vector<8x128xf32>
    %cst_69 = arith.constant 1.000000e+00 : f32
    %183 = vector.broadcast %cst_69 : f32 to vector<8x128xf32>
    %184 = arith.addf %183, %182 : vector<8x128xf32>
    %185 = arith.divf %183, %184 : vector<8x128xf32>
    %186 = vector.extract_strided_slice %185 {offsets = [0, 0], sizes = [8, 32], strides = [1, 1]} : vector<8x128xf32> to vector<8x32xf32>
    %187 = vector.extract_strided_slice %185 {offsets = [0, 32], sizes = [8, 32], strides = [1, 1]} : vector<8x128xf32> to vector<8x32xf32>
    %188 = vector.extract_strided_slice %185 {offsets = [0, 64], sizes = [8, 32], strides = [1, 1]} : vector<8x128xf32> to vector<8x32xf32>
    %cst_70 = arith.constant 2.000000e+00 : f32
    %189 = vector.broadcast %cst_70 : f32 to vector<8x32xf32>
    %190 = arith.mulf %189, %188 : vector<8x32xf32>
    %cst_71 = arith.constant 1.000000e+00 : f32
    %191 = vector.broadcast %cst_71 : f32 to vector<8x32xf32>
    %192 = arith.subf %190, %191 : vector<8x32xf32>
    %193 = vector.extract_strided_slice %185 {offsets = [0, 96], sizes = [8, 32], strides = [1, 1]} : vector<8x128xf32> to vector<8x32xf32>
    %194 = arith.mulf %187, %164 : vector<8x32xf32>
    %195 = arith.mulf %186, %192 : vector<8x32xf32>
    %196 = arith.addf %194, %195 : vector<8x32xf32>
    %cst_72 = arith.constant 2.000000e+00 : f32
    %197 = vector.broadcast %cst_72 : f32 to vector<8x32xf32>
    %198 = arith.mulf %197, %196 : vector<8x32xf32>
    %199 = arith.negf %198 : vector<8x32xf32>
    %200 = math.exp %199 : vector<8x32xf32>
    %cst_73 = arith.constant 1.000000e+00 : f32
    %201 = vector.broadcast %cst_73 : f32 to vector<8x32xf32>
    %202 = arith.addf %201, %200 : vector<8x32xf32>
    %203 = arith.divf %201, %202 : vector<8x32xf32>
    %cst_74 = arith.constant 2.000000e+00 : f32
    %204 = vector.broadcast %cst_74 : f32 to vector<8x32xf32>
    %205 = arith.mulf %204, %203 : vector<8x32xf32>
    %cst_75 = arith.constant 1.000000e+00 : f32
    %206 = vector.broadcast %cst_75 : f32 to vector<8x32xf32>
    %207 = arith.subf %205, %206 : vector<8x32xf32>
    %208 = arith.mulf %193, %207 : vector<8x32xf32>
    %c48 = arith.constant 48 : index
    %c0_76 = arith.constant 0 : index
    %209 = vector.load %arg12[%c48, %c0_76] : memref<64x128xf32, #tpu.memory_space<vmem>>, vector<8x128xf32>
    %210 = arith.truncf %208 : vector<8x32xf32> to vector<8x32xbf16>
    %cst_77 = arith.constant dense<0.000000e+00> : vector<8x128xf32>
    %211 = tpu.matmul %210, %0, %cst_77 {dimension_numbers = #tpu.dot_dimension_numbers<[1], [0], [0], [1], [0, 0, 1, 1], [], []>} : vector<8x32xbf16>, vector<32x128xbf16>, vector<8x128xf32> -> vector<8x128xf32>
    %212 = arith.addf %209, %211 : vector<8x128xf32>
    %213 = arith.negf %212 : vector<8x128xf32>
    %214 = math.exp %213 : vector<8x128xf32>
    %cst_78 = arith.constant 1.000000e+00 : f32
    %215 = vector.broadcast %cst_78 : f32 to vector<8x128xf32>
    %216 = arith.addf %215, %214 : vector<8x128xf32>
    %217 = arith.divf %215, %216 : vector<8x128xf32>
    %218 = vector.extract_strided_slice %217 {offsets = [0, 0], sizes = [8, 32], strides = [1, 1]} : vector<8x128xf32> to vector<8x32xf32>
    %219 = vector.extract_strided_slice %217 {offsets = [0, 32], sizes = [8, 32], strides = [1, 1]} : vector<8x128xf32> to vector<8x32xf32>
    %220 = vector.extract_strided_slice %217 {offsets = [0, 64], sizes = [8, 32], strides = [1, 1]} : vector<8x128xf32> to vector<8x32xf32>
    %cst_79 = arith.constant 2.000000e+00 : f32
    %221 = vector.broadcast %cst_79 : f32 to vector<8x32xf32>
    %222 = arith.mulf %221, %220 : vector<8x32xf32>
    %cst_80 = arith.constant 1.000000e+00 : f32
    %223 = vector.broadcast %cst_80 : f32 to vector<8x32xf32>
    %224 = arith.subf %222, %223 : vector<8x32xf32>
    %225 = vector.extract_strided_slice %217 {offsets = [0, 96], sizes = [8, 32], strides = [1, 1]} : vector<8x128xf32> to vector<8x32xf32>
    %226 = arith.mulf %219, %196 : vector<8x32xf32>
    %227 = arith.mulf %218, %224 : vector<8x32xf32>
    %228 = arith.addf %226, %227 : vector<8x32xf32>
    %cst_81 = arith.constant 2.000000e+00 : f32
    %229 = vector.broadcast %cst_81 : f32 to vector<8x32xf32>
    %230 = arith.mulf %229, %228 : vector<8x32xf32>
    %231 = arith.negf %230 : vector<8x32xf32>
    %232 = math.exp %231 : vector<8x32xf32>
    %cst_82 = arith.constant 1.000000e+00 : f32
    %233 = vector.broadcast %cst_82 : f32 to vector<8x32xf32>
    %234 = arith.addf %233, %232 : vector<8x32xf32>
    %235 = arith.divf %233, %234 : vector<8x32xf32>
    %cst_83 = arith.constant 2.000000e+00 : f32
    %236 = vector.broadcast %cst_83 : f32 to vector<8x32xf32>
    %237 = arith.mulf %236, %235 : vector<8x32xf32>
    %cst_84 = arith.constant 1.000000e+00 : f32
    %238 = vector.broadcast %cst_84 : f32 to vector<8x32xf32>
    %239 = arith.subf %237, %238 : vector<8x32xf32>
    %240 = arith.mulf %225, %239 : vector<8x32xf32>
    %c56 = arith.constant 56 : index
    %c0_85 = arith.constant 0 : index
    %241 = vector.load %arg12[%c56, %c0_85] : memref<64x128xf32, #tpu.memory_space<vmem>>, vector<8x128xf32>
    %242 = arith.truncf %240 : vector<8x32xf32> to vector<8x32xbf16>
    %cst_86 = arith.constant dense<0.000000e+00> : vector<8x128xf32>
    %243 = tpu.matmul %242, %0, %cst_86 {dimension_numbers = #tpu.dot_dimension_numbers<[1], [0], [0], [1], [0, 0, 1, 1], [], []>} : vector<8x32xbf16>, vector<32x128xbf16>, vector<8x128xf32> -> vector<8x128xf32>
    %244 = arith.addf %241, %243 : vector<8x128xf32>
    %245 = arith.negf %244 : vector<8x128xf32>
    %246 = math.exp %245 : vector<8x128xf32>
    %cst_87 = arith.constant 1.000000e+00 : f32
    %247 = vector.broadcast %cst_87 : f32 to vector<8x128xf32>
    %248 = arith.addf %247, %246 : vector<8x128xf32>
    %249 = arith.divf %247, %248 : vector<8x128xf32>
    %250 = vector.extract_strided_slice %249 {offsets = [0, 0], sizes = [8, 32], strides = [1, 1]} : vector<8x128xf32> to vector<8x32xf32>
    %251 = vector.extract_strided_slice %249 {offsets = [0, 32], sizes = [8, 32], strides = [1, 1]} : vector<8x128xf32> to vector<8x32xf32>
    %252 = vector.extract_strided_slice %249 {offsets = [0, 64], sizes = [8, 32], strides = [1, 1]} : vector<8x128xf32> to vector<8x32xf32>
    %cst_88 = arith.constant 2.000000e+00 : f32
    %253 = vector.broadcast %cst_88 : f32 to vector<8x32xf32>
    %254 = arith.mulf %253, %252 : vector<8x32xf32>
    %cst_89 = arith.constant 1.000000e+00 : f32
    %255 = vector.broadcast %cst_89 : f32 to vector<8x32xf32>
    %256 = arith.subf %254, %255 : vector<8x32xf32>
    %257 = vector.extract_strided_slice %249 {offsets = [0, 96], sizes = [8, 32], strides = [1, 1]} : vector<8x128xf32> to vector<8x32xf32>
    %258 = arith.mulf %251, %228 : vector<8x32xf32>
    %259 = arith.mulf %250, %256 : vector<8x32xf32>
    %260 = arith.addf %258, %259 : vector<8x32xf32>
    %cst_90 = arith.constant 2.000000e+00 : f32
    %261 = vector.broadcast %cst_90 : f32 to vector<8x32xf32>
    %262 = arith.mulf %261, %260 : vector<8x32xf32>
    %263 = arith.negf %262 : vector<8x32xf32>
    %264 = math.exp %263 : vector<8x32xf32>
    %cst_91 = arith.constant 1.000000e+00 : f32
    %265 = vector.broadcast %cst_91 : f32 to vector<8x32xf32>
    %266 = arith.addf %265, %264 : vector<8x32xf32>
    %267 = arith.divf %265, %266 : vector<8x32xf32>
    %cst_92 = arith.constant 2.000000e+00 : f32
    %268 = vector.broadcast %cst_92 : f32 to vector<8x32xf32>
    %269 = arith.mulf %268, %267 : vector<8x32xf32>
    %cst_93 = arith.constant 1.000000e+00 : f32
    %270 = vector.broadcast %cst_93 : f32 to vector<8x32xf32>
    %271 = arith.subf %269, %270 : vector<8x32xf32>
    %272 = arith.mulf %257, %271 : vector<8x32xf32>
    %c56_94 = arith.constant 56 : index
    %c0_95 = arith.constant 0 : index
    %273 = vector.load %arg0[%c56_94, %c0_95] : memref<64x2xf32, #tpu.memory_space<vmem>>, vector<8x2xf32>
    %274 = arith.truncf %273 : vector<8x2xf32> to vector<8x2xbf16>
    %cst_96 = arith.constant dense<0.000000e+00> : vector<8x128xf32>
    %275 = tpu.matmul %274, %1, %cst_96 {dimension_numbers = #tpu.dot_dimension_numbers<[1], [0], [0], [1], [0, 0, 1, 1], [], []>} : vector<8x2xbf16>, vector<2x128xbf16>, vector<8x128xf32> -> vector<8x128xf32>
    %276 = arith.truncf %272 : vector<8x32xf32> to vector<8x32xbf16>
    %cst_97 = arith.constant dense<0.000000e+00> : vector<8x128xf32>
    %277 = tpu.matmul %276, %2, %cst_97 {dimension_numbers = #tpu.dot_dimension_numbers<[1], [0], [0], [1], [0, 0, 1, 1], [], []>} : vector<8x32xbf16>, vector<32x128xbf16>, vector<8x128xf32> -> vector<8x128xf32>
    %278 = arith.addf %275, %277 : vector<8x128xf32>
    %279 = vector.broadcast %4 : vector<1x128xf32> to vector<8x128xf32>
    %280 = arith.addf %278, %279 : vector<8x128xf32>
    %281 = arith.negf %280 : vector<8x128xf32>
    %282 = math.exp %281 : vector<8x128xf32>
    %cst_98 = arith.constant 1.000000e+00 : f32
    %283 = vector.broadcast %cst_98 : f32 to vector<8x128xf32>
    %284 = arith.addf %283, %282 : vector<8x128xf32>
    %285 = arith.divf %283, %284 : vector<8x128xf32>
    %286 = vector.extract_strided_slice %285 {offsets = [0, 0], sizes = [8, 32], strides = [1, 1]} : vector<8x128xf32> to vector<8x32xf32>
    %287 = vector.extract_strided_slice %285 {offsets = [0, 32], sizes = [8, 32], strides = [1, 1]} : vector<8x128xf32> to vector<8x32xf32>
    %288 = vector.extract_strided_slice %285 {offsets = [0, 64], sizes = [8, 32], strides = [1, 1]} : vector<8x128xf32> to vector<8x32xf32>
    %cst_99 = arith.constant 2.000000e+00 : f32
    %289 = vector.broadcast %cst_99 : f32 to vector<8x32xf32>
    %290 = arith.mulf %289, %288 : vector<8x32xf32>
    %cst_100 = arith.constant 1.000000e+00 : f32
    %291 = vector.broadcast %cst_100 : f32 to vector<8x32xf32>
    %292 = arith.subf %290, %291 : vector<8x32xf32>
    %293 = vector.extract_strided_slice %285 {offsets = [0, 96], sizes = [8, 32], strides = [1, 1]} : vector<8x128xf32> to vector<8x32xf32>
    %294 = arith.mulf %287, %260 : vector<8x32xf32>
    %295 = arith.mulf %286, %292 : vector<8x32xf32>
    %296 = arith.addf %294, %295 : vector<8x32xf32>
    %cst_101 = arith.constant 2.000000e+00 : f32
    %297 = vector.broadcast %cst_101 : f32 to vector<8x32xf32>
    %298 = arith.mulf %297, %296 : vector<8x32xf32>
    %299 = arith.negf %298 : vector<8x32xf32>
    %300 = math.exp %299 : vector<8x32xf32>
    %cst_102 = arith.constant 1.000000e+00 : f32
    %301 = vector.broadcast %cst_102 : f32 to vector<8x32xf32>
    %302 = arith.addf %301, %300 : vector<8x32xf32>
    %303 = arith.divf %301, %302 : vector<8x32xf32>
    %cst_103 = arith.constant 2.000000e+00 : f32
    %304 = vector.broadcast %cst_103 : f32 to vector<8x32xf32>
    %305 = arith.mulf %304, %303 : vector<8x32xf32>
    %cst_104 = arith.constant 1.000000e+00 : f32
    %306 = vector.broadcast %cst_104 : f32 to vector<8x32xf32>
    %307 = arith.subf %305, %306 : vector<8x32xf32>
    %308 = arith.mulf %293, %307 : vector<8x32xf32>
    %c0_105 = arith.constant 0 : index
    %c0_106 = arith.constant 0 : index
    %309 = vector.load %arg13[%c0_105, %c0_106] : memref<48x32xf32, #tpu.memory_space<vmem>>, vector<8x32xf32>
    tpu.vector_store %arg13[%c0_105, %c0_106], %308 {strides = array<i32>} : memref<48x32xf32, #tpu.memory_space<vmem>>, vector<8x32xf32>,
    %310 = arith.truncf %308 : vector<8x32xf32> to vector<8x32xbf16>
    %cst_107 = arith.constant dense<0.000000e+00> : vector<8x128xf32>
    %311 = tpu.matmul %310, %3, %cst_107 {dimension_numbers = #tpu.dot_dimension_numbers<[1], [0], [0], [1], [0, 0, 1, 1], [], []>} : vector<8x32xbf16>, vector<32x128xbf16>, vector<8x128xf32> -> vector<8x128xf32>
    %312 = arith.addf %311, %7 : vector<8x128xf32>
    %313 = arith.negf %312 : vector<8x128xf32>
    %314 = math.exp %313 : vector<8x128xf32>
    %cst_108 = arith.constant 1.000000e+00 : f32
    %315 = vector.broadcast %cst_108 : f32 to vector<8x128xf32>
    %316 = arith.addf %315, %314 : vector<8x128xf32>
    %317 = arith.divf %315, %316 : vector<8x128xf32>
    %318 = vector.extract_strided_slice %317 {offsets = [0, 0], sizes = [8, 32], strides = [1, 1]} : vector<8x128xf32> to vector<8x32xf32>
    %319 = vector.extract_strided_slice %317 {offsets = [0, 32], sizes = [8, 32], strides = [1, 1]} : vector<8x128xf32> to vector<8x32xf32>
    %320 = vector.extract_strided_slice %317 {offsets = [0, 64], sizes = [8, 32], strides = [1, 1]} : vector<8x128xf32> to vector<8x32xf32>
    %cst_109 = arith.constant 2.000000e+00 : f32
    %321 = vector.broadcast %cst_109 : f32 to vector<8x32xf32>
    %322 = arith.mulf %321, %320 : vector<8x32xf32>
    %cst_110 = arith.constant 1.000000e+00 : f32
    %323 = vector.broadcast %cst_110 : f32 to vector<8x32xf32>
    %324 = arith.subf %322, %323 : vector<8x32xf32>
    %325 = vector.extract_strided_slice %317 {offsets = [0, 96], sizes = [8, 32], strides = [1, 1]} : vector<8x128xf32> to vector<8x32xf32>
    %326 = arith.mulf %319, %296 : vector<8x32xf32>
    %327 = arith.mulf %318, %324 : vector<8x32xf32>
    %328 = arith.addf %326, %327 : vector<8x32xf32>
    %cst_111 = arith.constant 2.000000e+00 : f32
    %329 = vector.broadcast %cst_111 : f32 to vector<8x32xf32>
    %330 = arith.mulf %329, %328 : vector<8x32xf32>
    %331 = arith.negf %330 : vector<8x32xf32>
    %332 = math.exp %331 : vector<8x32xf32>
    %cst_112 = arith.constant 1.000000e+00 : f32
    %333 = vector.broadcast %cst_112 : f32 to vector<8x32xf32>
    %334 = arith.addf %333, %332 : vector<8x32xf32>
    %335 = arith.divf %333, %334 : vector<8x32xf32>
    %cst_113 = arith.constant 2.000000e+00 : f32
    %336 = vector.broadcast %cst_113 : f32 to vector<8x32xf32>
    %337 = arith.mulf %336, %335 : vector<8x32xf32>
    %cst_114 = arith.constant 1.000000e+00 : f32
    %338 = vector.broadcast %cst_114 : f32 to vector<8x32xf32>
    %339 = arith.subf %337, %338 : vector<8x32xf32>
    %340 = arith.mulf %325, %339 : vector<8x32xf32>
    %c8_115 = arith.constant 8 : index
    %c0_116 = arith.constant 0 : index
    %341 = vector.load %arg13[%c8_115, %c0_116] : memref<48x32xf32, #tpu.memory_space<vmem>>, vector<8x32xf32>
    tpu.vector_store %arg13[%c8_115, %c0_116], %340 {strides = array<i32>} : memref<48x32xf32, #tpu.memory_space<vmem>>, vector<8x32xf32>,
    %342 = arith.truncf %340 : vector<8x32xf32> to vector<8x32xbf16>
    %cst_117 = arith.constant dense<0.000000e+00> : vector<8x128xf32>
    %343 = tpu.matmul %342, %3, %cst_117 {dimension_numbers = #tpu.dot_dimension_numbers<[1], [0], [0], [1], [0, 0, 1, 1], [], []>} : vector<8x32xbf16>, vector<32x128xbf16>, vector<8x128xf32> -> vector<8x128xf32>
    %344 = arith.addf %343, %7 : vector<8x128xf32>
    %345 = arith.negf %344 : vector<8x128xf32>
    %346 = math.exp %345 : vector<8x128xf32>
    %cst_118 = arith.constant 1.000000e+00 : f32
    %347 = vector.broadcast %cst_118 : f32 to vector<8x128xf32>
    %348 = arith.addf %347, %346 : vector<8x128xf32>
    %349 = arith.divf %347, %348 : vector<8x128xf32>
    %350 = vector.extract_strided_slice %349 {offsets = [0, 0], sizes = [8, 32], strides = [1, 1]} : vector<8x128xf32> to vector<8x32xf32>
    %351 = vector.extract_strided_slice %349 {offsets = [0, 32], sizes = [8, 32], strides = [1, 1]} : vector<8x128xf32> to vector<8x32xf32>
    %352 = vector.extract_strided_slice %349 {offsets = [0, 64], sizes = [8, 32], strides = [1, 1]} : vector<8x128xf32> to vector<8x32xf32>
    %cst_119 = arith.constant 2.000000e+00 : f32
    %353 = vector.broadcast %cst_119 : f32 to vector<8x32xf32>
    %354 = arith.mulf %353, %352 : vector<8x32xf32>
    %cst_120 = arith.constant 1.000000e+00 : f32
    %355 = vector.broadcast %cst_120 : f32 to vector<8x32xf32>
    %356 = arith.subf %354, %355 : vector<8x32xf32>
    %357 = vector.extract_strided_slice %349 {offsets = [0, 96], sizes = [8, 32], strides = [1, 1]} : vector<8x128xf32> to vector<8x32xf32>
    %358 = arith.mulf %351, %328 : vector<8x32xf32>
    %359 = arith.mulf %350, %356 : vector<8x32xf32>
    %360 = arith.addf %358, %359 : vector<8x32xf32>
    %cst_121 = arith.constant 2.000000e+00 : f32
    %361 = vector.broadcast %cst_121 : f32 to vector<8x32xf32>
    %362 = arith.mulf %361, %360 : vector<8x32xf32>
    %363 = arith.negf %362 : vector<8x32xf32>
    %364 = math.exp %363 : vector<8x32xf32>
    %cst_122 = arith.constant 1.000000e+00 : f32
    %365 = vector.broadcast %cst_122 : f32 to vector<8x32xf32>
    %366 = arith.addf %365, %364 : vector<8x32xf32>
    %367 = arith.divf %365, %366 : vector<8x32xf32>
    %cst_123 = arith.constant 2.000000e+00 : f32
    %368 = vector.broadcast %cst_123 : f32 to vector<8x32xf32>
    %369 = arith.mulf %368, %367 : vector<8x32xf32>
    %cst_124 = arith.constant 1.000000e+00 : f32
    %370 = vector.broadcast %cst_124 : f32 to vector<8x32xf32>
    %371 = arith.subf %369, %370 : vector<8x32xf32>
    %372 = arith.mulf %357, %371 : vector<8x32xf32>
    %c16_125 = arith.constant 16 : index
    %c0_126 = arith.constant 0 : index
    %373 = vector.load %arg13[%c16_125, %c0_126] : memref<48x32xf32, #tpu.memory_space<vmem>>, vector<8x32xf32>
    tpu.vector_store %arg13[%c16_125, %c0_126], %372 {strides = array<i32>} : memref<48x32xf32, #tpu.memory_space<vmem>>, vector<8x32xf32>,
    %374 = arith.truncf %372 : vector<8x32xf32> to vector<8x32xbf16>
    %cst_127 = arith.constant dense<0.000000e+00> : vector<8x128xf32>
    %375 = tpu.matmul %374, %3, %cst_127 {dimension_numbers = #tpu.dot_dimension_numbers<[1], [0], [0], [1], [0, 0, 1, 1], [], []>} : vector<8x32xbf16>, vector<32x128xbf16>, vector<8x128xf32> -> vector<8x128xf32>
    %376 = arith.addf %375, %7 : vector<8x128xf32>
    %377 = arith.negf %376 : vector<8x128xf32>
    %378 = math.exp %377 : vector<8x128xf32>
    %cst_128 = arith.constant 1.000000e+00 : f32
    %379 = vector.broadcast %cst_128 : f32 to vector<8x128xf32>
    %380 = arith.addf %379, %378 : vector<8x128xf32>
    %381 = arith.divf %379, %380 : vector<8x128xf32>
    %382 = vector.extract_strided_slice %381 {offsets = [0, 0], sizes = [8, 32], strides = [1, 1]} : vector<8x128xf32> to vector<8x32xf32>
    %383 = vector.extract_strided_slice %381 {offsets = [0, 32], sizes = [8, 32], strides = [1, 1]} : vector<8x128xf32> to vector<8x32xf32>
    %384 = vector.extract_strided_slice %381 {offsets = [0, 64], sizes = [8, 32], strides = [1, 1]} : vector<8x128xf32> to vector<8x32xf32>
    %cst_129 = arith.constant 2.000000e+00 : f32
    %385 = vector.broadcast %cst_129 : f32 to vector<8x32xf32>
    %386 = arith.mulf %385, %384 : vector<8x32xf32>
    %cst_130 = arith.constant 1.000000e+00 : f32
    %387 = vector.broadcast %cst_130 : f32 to vector<8x32xf32>
    %388 = arith.subf %386, %387 : vector<8x32xf32>
    %389 = vector.extract_strided_slice %381 {offsets = [0, 96], sizes = [8, 32], strides = [1, 1]} : vector<8x128xf32> to vector<8x32xf32>
    %390 = arith.mulf %383, %360 : vector<8x32xf32>
    %391 = arith.mulf %382, %388 : vector<8x32xf32>
    %392 = arith.addf %390, %391 : vector<8x32xf32>
    %cst_131 = arith.constant 2.000000e+00 : f32
    %393 = vector.broadcast %cst_131 : f32 to vector<8x32xf32>
    %394 = arith.mulf %393, %392 : vector<8x32xf32>
    %395 = arith.negf %394 : vector<8x32xf32>
    %396 = math.exp %395 : vector<8x32xf32>
    %cst_132 = arith.constant 1.000000e+00 : f32
    %397 = vector.broadcast %cst_132 : f32 to vector<8x32xf32>
    %398 = arith.addf %397, %396 : vector<8x32xf32>
    %399 = arith.divf %397, %398 : vector<8x32xf32>
    %cst_133 = arith.constant 2.000000e+00 : f32
    %400 = vector.broadcast %cst_133 : f32 to vector<8x32xf32>
    %401 = arith.mulf %400, %399 : vector<8x32xf32>
    %cst_134 = arith.constant 1.000000e+00 : f32
    %402 = vector.broadcast %cst_134 : f32 to vector<8x32xf32>
    %403 = arith.subf %401, %402 : vector<8x32xf32>
    %404 = arith.mulf %389, %403 : vector<8x32xf32>
    %c24_135 = arith.constant 24 : index
    %c0_136 = arith.constant 0 : index
    %405 = vector.load %arg13[%c24_135, %c0_136] : memref<48x32xf32, #tpu.memory_space<vmem>>, vector<8x32xf32>
    tpu.vector_store %arg13[%c24_135, %c0_136], %404 {strides = array<i32>} : memref<48x32xf32, #tpu.memory_space<vmem>>, vector<8x32xf32>,
    %406 = arith.truncf %404 : vector<8x32xf32> to vector<8x32xbf16>
    %cst_137 = arith.constant dense<0.000000e+00> : vector<8x128xf32>
    %407 = tpu.matmul %406, %3, %cst_137 {dimension_numbers = #tpu.dot_dimension_numbers<[1], [0], [0], [1], [0, 0, 1, 1], [], []>} : vector<8x32xbf16>, vector<32x128xbf16>, vector<8x128xf32> -> vector<8x128xf32>
    %408 = arith.addf %407, %7 : vector<8x128xf32>
    %409 = arith.negf %408 : vector<8x128xf32>
    %410 = math.exp %409 : vector<8x128xf32>
    %cst_138 = arith.constant 1.000000e+00 : f32
    %411 = vector.broadcast %cst_138 : f32 to vector<8x128xf32>
    %412 = arith.addf %411, %410 : vector<8x128xf32>
    %413 = arith.divf %411, %412 : vector<8x128xf32>
    %414 = vector.extract_strided_slice %413 {offsets = [0, 0], sizes = [8, 32], strides = [1, 1]} : vector<8x128xf32> to vector<8x32xf32>
    %415 = vector.extract_strided_slice %413 {offsets = [0, 32], sizes = [8, 32], strides = [1, 1]} : vector<8x128xf32> to vector<8x32xf32>
    %416 = vector.extract_strided_slice %413 {offsets = [0, 64], sizes = [8, 32], strides = [1, 1]} : vector<8x128xf32> to vector<8x32xf32>
    %cst_139 = arith.constant 2.000000e+00 : f32
    %417 = vector.broadcast %cst_139 : f32 to vector<8x32xf32>
    %418 = arith.mulf %417, %416 : vector<8x32xf32>
    %cst_140 = arith.constant 1.000000e+00 : f32
    %419 = vector.broadcast %cst_140 : f32 to vector<8x32xf32>
    %420 = arith.subf %418, %419 : vector<8x32xf32>
    %421 = vector.extract_strided_slice %413 {offsets = [0, 96], sizes = [8, 32], strides = [1, 1]} : vector<8x128xf32> to vector<8x32xf32>
    %422 = arith.mulf %415, %392 : vector<8x32xf32>
    %423 = arith.mulf %414, %420 : vector<8x32xf32>
    %424 = arith.addf %422, %423 : vector<8x32xf32>
    %cst_141 = arith.constant 2.000000e+00 : f32
    %425 = vector.broadcast %cst_141 : f32 to vector<8x32xf32>
    %426 = arith.mulf %425, %424 : vector<8x32xf32>
    %427 = arith.negf %426 : vector<8x32xf32>
    %428 = math.exp %427 : vector<8x32xf32>
    %cst_142 = arith.constant 1.000000e+00 : f32
    %429 = vector.broadcast %cst_142 : f32 to vector<8x32xf32>
    %430 = arith.addf %429, %428 : vector<8x32xf32>
    %431 = arith.divf %429, %430 : vector<8x32xf32>
    %cst_143 = arith.constant 2.000000e+00 : f32
    %432 = vector.broadcast %cst_143 : f32 to vector<8x32xf32>
    %433 = arith.mulf %432, %431 : vector<8x32xf32>
    %cst_144 = arith.constant 1.000000e+00 : f32
    %434 = vector.broadcast %cst_144 : f32 to vector<8x32xf32>
    %435 = arith.subf %433, %434 : vector<8x32xf32>
    %436 = arith.mulf %421, %435 : vector<8x32xf32>
    %c32_145 = arith.constant 32 : index
    %c0_146 = arith.constant 0 : index
    %437 = vector.load %arg13[%c32_145, %c0_146] : memref<48x32xf32, #tpu.memory_space<vmem>>, vector<8x32xf32>
    tpu.vector_store %arg13[%c32_145, %c0_146], %436 {strides = array<i32>} : memref<48x32xf32, #tpu.memory_space<vmem>>, vector<8x32xf32>,
    %438 = arith.truncf %436 : vector<8x32xf32> to vector<8x32xbf16>
    %cst_147 = arith.constant dense<0.000000e+00> : vector<8x128xf32>
    %439 = tpu.matmul %438, %3, %cst_147 {dimension_numbers = #tpu.dot_dimension_numbers<[1], [0], [0], [1], [0, 0, 1, 1], [], []>} : vector<8x32xbf16>, vector<32x128xbf16>, vector<8x128xf32> -> vector<8x128xf32>
    %440 = arith.addf %439, %7 : vector<8x128xf32>
    %441 = arith.negf %440 : vector<8x128xf32>
    %442 = math.exp %441 : vector<8x128xf32>
    %cst_148 = arith.constant 1.000000e+00 : f32
    %443 = vector.broadcast %cst_148 : f32 to vector<8x128xf32>
    %444 = arith.addf %443, %442 : vector<8x128xf32>
    %445 = arith.divf %443, %444 : vector<8x128xf32>
    %446 = vector.extract_strided_slice %445 {offsets = [0, 0], sizes = [8, 32], strides = [1, 1]} : vector<8x128xf32> to vector<8x32xf32>
    %447 = vector.extract_strided_slice %445 {offsets = [0, 32], sizes = [8, 32], strides = [1, 1]} : vector<8x128xf32> to vector<8x32xf32>
    %448 = vector.extract_strided_slice %445 {offsets = [0, 64], sizes = [8, 32], strides = [1, 1]} : vector<8x128xf32> to vector<8x32xf32>
    %cst_149 = arith.constant 2.000000e+00 : f32
    %449 = vector.broadcast %cst_149 : f32 to vector<8x32xf32>
    %450 = arith.mulf %449, %448 : vector<8x32xf32>
    %cst_150 = arith.constant 1.000000e+00 : f32
    %451 = vector.broadcast %cst_150 : f32 to vector<8x32xf32>
    %452 = arith.subf %450, %451 : vector<8x32xf32>
    %453 = vector.extract_strided_slice %445 {offsets = [0, 96], sizes = [8, 32], strides = [1, 1]} : vector<8x128xf32> to vector<8x32xf32>
    %454 = arith.mulf %447, %424 : vector<8x32xf32>
    %455 = arith.mulf %446, %452 : vector<8x32xf32>
    %456 = arith.addf %454, %455 : vector<8x32xf32>
    %cst_151 = arith.constant 2.000000e+00 : f32
    %457 = vector.broadcast %cst_151 : f32 to vector<8x32xf32>
    %458 = arith.mulf %457, %456 : vector<8x32xf32>
    %459 = arith.negf %458 : vector<8x32xf32>
    %460 = math.exp %459 : vector<8x32xf32>
    %cst_152 = arith.constant 1.000000e+00 : f32
    %461 = vector.broadcast %cst_152 : f32 to vector<8x32xf32>
    %462 = arith.addf %461, %460 : vector<8x32xf32>
    %463 = arith.divf %461, %462 : vector<8x32xf32>
    %cst_153 = arith.constant 2.000000e+00 : f32
    %464 = vector.broadcast %cst_153 : f32 to vector<8x32xf32>
    %465 = arith.mulf %464, %463 : vector<8x32xf32>
    %cst_154 = arith.constant 1.000000e+00 : f32
    %466 = vector.broadcast %cst_154 : f32 to vector<8x32xf32>
    %467 = arith.subf %465, %466 : vector<8x32xf32>
    %468 = arith.mulf %453, %467 : vector<8x32xf32>
    %c40_155 = arith.constant 40 : index
    %c0_156 = arith.constant 0 : index
    %469 = vector.load %arg13[%c40_155, %c0_156] : memref<48x32xf32, #tpu.memory_space<vmem>>, vector<8x32xf32>
    tpu.vector_store %arg13[%c40_155, %c0_156], %468 {strides = array<i32>} : memref<48x32xf32, #tpu.memory_space<vmem>>, vector<8x32xf32>,
    %c0_157 = arith.constant 0 : index
    %c0_158 = arith.constant 0 : index
    %470 = vector.load %arg13[%c0_157, %c0_158] : memref<48x32xf32, #tpu.memory_space<vmem>>, vector<48x32xf32>
    %c0_159 = arith.constant 0 : index
    %c0_160 = arith.constant 0 : index
    %471 = vector.load %arg9[%c0_159, %c0_160] : memref<32x128xf32, #tpu.memory_space<vmem>>, vector<32x128xf32>
    %cst_161 = arith.constant dense<0.000000e+00> : vector<48x128xf32>
    %472 = tpu.matmul %470, %471, %cst_161 {dimension_numbers = #tpu.dot_dimension_numbers<[1], [0], [0], [1], [0, 0, 1, 1], [], []>} : vector<48x32xf32>, vector<32x128xf32>, vector<48x128xf32> -> vector<48x128xf32>
    %c0_162 = arith.constant 0 : index
    %c0_163 = arith.constant 0 : index
    %473 = vector.load %arg10[%c0_162, %c0_163] : memref<1x128xf32, #tpu.memory_space<vmem>>, vector<1x128xf32>
    %474 = vector.broadcast %473 : vector<1x128xf32> to vector<48x128xf32>
    %475 = arith.addf %472, %474 : vector<48x128xf32>
    %c0_164 = arith.constant 0 : index
    %c0_165 = arith.constant 0 : index
    %476 = vector.load %arg11[%c0_164, %c0_165] : memref<48x128xf32, #tpu.memory_space<vmem>>, vector<48x128xf32>
    tpu.vector_store %arg11[%c0_164, %c0_165], %475 {strides = array<i32>} : memref<48x128xf32, #tpu.memory_space<vmem>>, vector<48x128xf32>,
    return
  }
}

</mosaic_0001>

<llo_original>
// kernel: tpu_custom_call.1
$region0: #{tpu_custom_call.1}
  #allocation0 [shape = 'u32[]', space=smem, size = 0x4, offset = 0x4, fixed_abs, tag = 'smem constant byte address 0x4 - core index']
  #allocation1 [shape = 'u32[144,128]{1,0:T(1,128)}', space=vmem, size = 0x12000, scoped, tag = 'internal scratch']
  #allocation2 [shape = 'f32[64,128]{1,0:T(8,128)}', space=vmem, size = 0x8000, scoped, tag = 'scratch operand']
  #allocation3 [shape = 'f32[48,32]{1,0:T(8,128)}', space=vmem, size = 0x6000, scoped, tag = 'scratch operand']
  %s0 = inlined_call_operand.vmem [shape: f32[64,2], index: 0, kind: input, shape index: {}]
  %s1 = inlined_call_operand.hbm [shape: f32[2,128], index: 1, kind: input, shape index: {}]
  %s2 = inlined_call_operand.vmem [shape: f32[1,128], index: 2, kind: input, shape index: {}]
  %s3 = inlined_call_operand.vmem [shape: bf16[32,128], index: 3, kind: input, shape index: {}]
  %s4 = inlined_call_operand.hbm [shape: bf16[2,128], index: 4, kind: input, shape index: {}]
  %s5 = inlined_call_operand.vmem [shape: bf16[32,128], index: 5, kind: input, shape index: {}]
  %s6 = inlined_call_operand.vmem [shape: f32[1,128], index: 6, kind: input, shape index: {}]
  %s7 = inlined_call_operand.vmem [shape: bf16[32,128], index: 7, kind: input, shape index: {}]
  %s8 = inlined_call_operand.vmem [shape: f32[1,128], index: 8, kind: input, shape index: {}]
  %s9 = inlined_call_operand.vmem [shape: f32[32,128], index: 9, kind: input, shape index: {}]
  %s10 = inlined_call_operand.vmem [shape: f32[1,128], index: 10, kind: input, shape index: {}]
  %s11 = inlined_call_operand.hbm [shape: f32[48,128], index: 11, kind: output, shape index: {}]
  %s12 = sld [smem:[#allocation0]]
  $region62: #{tpu_custom_call.1} parent=0
    _
  %s14 = ssub.s32 1, %s12
  %s15 = scalar_select 0, %s14, %s12
  $region1: #{tpu_custom_call.1} parent=0
    #allocation4 [shape = 'u8[1024]{0}', space=vmem, size = 0x400, scoped, tag = 'input window, operand 1, single buffered']
    #allocation5 [shape = 's32[1]{0}', space=sflag, size = 0x4, scoped, tag = 'scoped memory for tpu_custom_call.1']
    #allocation6 [shape = 's32[1]{0}', space=sflag, size = 0x4, scoped, tag = 'scoped memory for tpu_custom_call.1']
    #allocation7 [shape = 'u8[512]{0}', space=vmem, size = 0x400, scoped, tag = 'input window, operand 4, single buffered']
    #allocation8 [shape = 's32[1]{0}', space=sflag, size = 0x4, scoped, tag = 'scoped memory for tpu_custom_call.1']
    #allocation9 [shape = 'u8[24576]{0}', space=vmem, size = 0x6000, scoped, tag = 'output window, operand 0, single buffered']
    %16 = vsyncpa [#allocation5], 0
    %17 = vsyncpa [#allocation8], 0
    %18 = vsyncpa [#allocation6], 0
    // Predicated region
    $region2: #{tpu_custom_call.1} parent=1 // pred_check
      _
    $region3: #{tpu_custom_call.1} parent=1 // pred_check_branch
      %20 = sbr.rel (0) target = $region5
    $region4: #{tpu_custom_call.1} parent=1 // pred_region
      _
    $region5: #{tpu_custom_call.1} parent=1 // pred_fallthru
      _
    // Predicated region
    $region6: #{tpu_custom_call.1} parent=1 // pred_check
      _
    $region7: #{tpu_custom_call.1} parent=1 // pred_check_branch
      %22 = sbr.rel (0) target = $region9
    $region8: #{tpu_custom_call.1} parent=1 // pred_region
      %s24 = ssub.s32 32, 32
      %25 = vsyncadd [#allocation5], %s24
      %s27 = sshll.u32 [#allocation4], 4
      %s28 = int_to_ptr.vmem [resolvable:$true] %s27
      %30 = dma.hbm_to_vmem [thread:$0]  %s1, 32, %s28, [#allocation5]
    $region9: #{tpu_custom_call.1} parent=1 // pred_fallthru
      _
    // Predicated region
    $region10: #{tpu_custom_call.1} parent=1 // pred_check
      _
    $region11: #{tpu_custom_call.1} parent=1 // pred_check_branch
      %32 = sbr.rel (0) target = $region13
    $region12: #{tpu_custom_call.1} parent=1 // pred_region
      _
    $region13: #{tpu_custom_call.1} parent=1 // pred_fallthru
      _
    // Predicated region
    $region14: #{tpu_custom_call.1} parent=1 // pred_check
      _
    $region15: #{tpu_custom_call.1} parent=1 // pred_check_branch
      %34 = sbr.rel (0) target = $region17
    $region16: #{tpu_custom_call.1} parent=1 // pred_region
      _
    $region17: #{tpu_custom_call.1} parent=1 // pred_fallthru
      _
    // Predicated region
    $region18: #{tpu_custom_call.1} parent=1 // pred_check
      _
    $region19: #{tpu_custom_call.1} parent=1 // pred_check_branch
      %36 = sbr.rel (0) target = $region21
    $region20: #{tpu_custom_call.1} parent=1 // pred_region
      %s38 = ssub.s32 16, 16
      %39 = vsyncadd [#allocation8], %s38
      %s41 = sshll.u32 [#allocation7], 4
      %s42 = int_to_ptr.vmem [resolvable:$true] %s41
      %44 = dma.hbm_to_vmem [thread:$0]  %s4, 16, %s42, [#allocation8]
    $region21: #{tpu_custom_call.1} parent=1 // pred_fallthru
      _
    // Predicated region
    $region22: #{tpu_custom_call.1} parent=1 // pred_check
      _
    $region23: #{tpu_custom_call.1} parent=1 // pred_check_branch
      %46 = sbr.rel (0) target = $region25
    $region24: #{tpu_custom_call.1} parent=1 // pred_region
      _
    $region25: #{tpu_custom_call.1} parent=1 // pred_fallthru
      _
    // Predicated region
    $region26: #{tpu_custom_call.1} parent=1 // pred_check
      _
    $region27: #{tpu_custom_call.1} parent=1 // pred_check_branch
      %48 = sbr.rel (0) target = $region29
    $region28: #{tpu_custom_call.1} parent=1 // pred_region
      _
    $region29: #{tpu_custom_call.1} parent=1 // pred_fallthru
      _
    // Predicated region
    $region30: #{tpu_custom_call.1} parent=1 // pred_check
      _
    $region31: #{tpu_custom_call.1} parent=1 // pred_check_branch
      %50 = sbr.rel (0) target = $region33
    $region32: #{tpu_custom_call.1} parent=1 // pred_region
      _
    $region33: #{tpu_custom_call.1} parent=1 // pred_fallthru
      _
    // Predicated region
    $region34: #{tpu_custom_call.1} parent=1 // pred_check
      _
    $region35: #{tpu_custom_call.1} parent=1 // pred_check_branch
      %52 = sbr.rel (0) target = $region37
    $region36: #{tpu_custom_call.1} parent=1 // pred_region
      _
    $region37: #{tpu_custom_call.1} parent=1 // pred_fallthru
      _
    // Predicated region
    $region38: #{tpu_custom_call.1} parent=1 // pred_check
      _
    $region39: #{tpu_custom_call.1} parent=1 // pred_check_branch
      %54 = sbr.rel (0) target = $region41
    $region40: #{tpu_custom_call.1} parent=1 // pred_region
      _
    $region41: #{tpu_custom_call.1} parent=1 // pred_fallthru
      _
    // Predicated region
    $region42: #{tpu_custom_call.1} parent=1 // pred_check
      _
    $region43: #{tpu_custom_call.1} parent=1 // pred_check_branch
      %56 = sbr.rel (0) target = $region45
    $region44: #{tpu_custom_call.1} parent=1 // pred_region
      _
    $region45: #{tpu_custom_call.1} parent=1 // pred_fallthru
      _
    // Predicated region
    $region46: #{tpu_custom_call.1} parent=1 // pred_check
      _
    $region47: #{tpu_custom_call.1} parent=1 // pred_check_branch
      %58 = sbr.rel (0) target = $region49
    $region48: #{tpu_custom_call.1} parent=1 // pred_region
      %59 = dma.done [#allocation5], 32
    $region49: #{tpu_custom_call.1} parent=1 // pred_fallthru
      _
    // Predicated region
    $region50: #{tpu_custom_call.1} parent=1 // pred_check
      _
    $region51: #{tpu_custom_call.1} parent=1 // pred_check_branch
      %61 = sbr.rel (0) target = $region53
    $region52: #{tpu_custom_call.1} parent=1 // pred_region
      %62 = dma.done [#allocation8], 16
    $region53: #{tpu_custom_call.1} parent=1 // pred_fallthru
      _
    %v64 = vld [vmem:[%s3] sm:$0xf]
    %v65 = vld [vmem:[%s3 + $0x4] sm:$0xf]
    %v66 = vld [vmem:[%s3 + $0x8] sm:$0xf]
    %v67 = vld [vmem:[%s3 + $0xc] sm:$0xf]
    %v68 = vld [vmem:[#allocation7] sm:$0x1]
    %v69 = vld [vmem:[%s5] sm:$0xf]
    %v70 = vld [vmem:[%s5 + $0x4] sm:$0xf]
    %v71 = vld [vmem:[%s5 + $0x8] sm:$0xf]
    %v72 = vld [vmem:[%s5 + $0xc] sm:$0xf]
    %v73 = vld [vmem:[%s7] sm:$0xf]
    %v74 = vld [vmem:[%s7 + $0x4] sm:$0xf]
    %v75 = vld [vmem:[%s7 + $0x8] sm:$0xf]
    %v76 = vld [vmem:[%s7 + $0xc] sm:$0xf]
    %v77 = vld [vmem:[%s6] sm:$0x1]
    %v78 = vld [vmem:[%s8] sm:$0x1]
    %v80 = vlaneseq
    %v81 = vshrl.u32 %v80, 7
    %v82 = vsub.s32 0, %v81
    %v83 = vrot.slane %v78, %v82
    %v85 = vld [vmem:[%s0] sm:$0xff]
    %v86 = vld [vmem:[%s0 + $0x8] sm:$0xff]
    %v87 = vld [vmem:[%s0 + $0x10] sm:$0xff]
    %v88 = vld [vmem:[%s0 + $0x18] sm:$0xff]
    %v89 = vld [vmem:[%s0 + $0x20] sm:$0xff]
    %v90 = vld [vmem:[%s0 + $0x28] sm:$0xff]
    %v91 = vld [vmem:[%s0 + $0x30] sm:$0xff]
    %v92 = vld [vmem:[%s0 + $0x38] sm:$0xff]
    %v93 = vld [vmem:[#allocation4] sm:$0x3]
    %v94 = vld [vmem:[%s2] sm:$0x1]
    %v96 = vlaneseq
    %v97 = vshrl.u32 %v96, 7
    %v98 = vsub.s32 0, %v97
    %v99 = vrot.slane %v94, %v98
    %vm101 = vcmask 15360
    %v103 = vsel %vm101, %v85, 0
    %v106 = vsel %vm101, %v86, 0
    %v109 = vsel %vm101, %v87, 0
    %v112 = vsel %vm101, %v88, 0
    %v115 = vsel %vm101, %v89, 0
    %v118 = vsel %vm101, %v90, 0
    %v121 = vsel %vm101, %v91, 0
    %v124 = vsel %vm101, %v92, 0
    %vm126 = vcmask 1041408
    %v128 = vsel %vm126, %v93, 0
    %130 = vmatprep.subr.mxu0 0.0
    %131 = vmatpush1.msra.mxu0 %v128
    %132 = vmatprep.subr.mxu0 0.0
    %133 = vmatpush1.msra.mxu0 0.0
    %134 = vmatprep.subr.mxu0 0.0
    %135 = vmatpush1.msra.mxu0 0.0
    %136 = vmatprep.subr.mxu0 0.0
    %137 = vmatpush1.msra.mxu0 0.0
    %138 = vmatprep.subr.mxu0 0.0
    %139 = vmatpush1.msra.mxu0 0.0
    %140 = vmatprep.subr.mxu0 0.0
    %141 = vmatpush1.msra.mxu0 0.0
    %142 = vmatprep.subr.mxu0 0.0
    %143 = vmatpush1.msra.mxu0 0.0
    %144 = vmatprep.subr.mxu0 0.0
    %145 = vmatpush1.msra.mxu0 0.0
    %146 = vmatprep.subr.mxu0 0.0
    %147 = vmatpush1.msra.mxu0 0.0
    %148 = vmatprep.subr.mxu0 0.0
    %149 = vmatpush1.msra.mxu0 0.0
    %150 = vmatprep.subr.mxu0 0.0
    %151 = vmatpush1.msra.mxu0 0.0
    %152 = vmatprep.subr.mxu0 0.0
    %153 = vmatpush1.msra.mxu0 0.0
    %154 = vmatprep.subr.mxu0 0.0
    %155 = vmatpush1.msra.mxu0 0.0
    %156 = vmatprep.subr.mxu0 0.0
    %157 = vmatpush1.msra.mxu0 0.0
    %158 = vmatprep.subr.mxu0 0.0
    %159 = vmatpush1.msra.mxu0 0.0
    %160 = vmatprep.subr.mxu0 0.0
    %161 = vmatpush1.msra.mxu0 0.0
    %162 = vmatprep.subr.mxu0 0.0
    %163 = vmatpush1.msra.mxu0 0.0
    %164 = vmatprep.subr.mxu0 0.0
    %165 = vmatpush1.msra.mxu0 0.0
    %166 = vmatprep.subr.mxu0 0.0
    %167 = vmatpush1.msra.mxu0 0.0
    %168 = vmatprep.subr.mxu0 0.0
    %169 = vmatpush1.msra.mxu0 0.0
    %170 = vmatprep.subr.mxu0 0.0
    %171 = vmatpush1.msra.mxu0 0.0
    %172 = vmatprep.subr.mxu0 0.0
    %173 = vmatpush1.msra.mxu0 0.0
    %174 = vmatprep.subr.mxu0 0.0
    %175 = vmatpush1.msra.mxu0 0.0
    %176 = vmatprep.subr.mxu0 0.0
    %177 = vmatpush1.msra.mxu0 0.0
    %178 = vmatprep.subr.mxu0 0.0
    %179 = vmatpush1.msra.mxu0 0.0
    %180 = vmatprep.subr.mxu0 0.0
    %181 = vmatpush1.msra.mxu0 0.0
    %182 = vmatprep.subr.mxu0 0.0
    %183 = vmatpush1.msra.mxu0 0.0
    %184 = vmatprep.subr.mxu0 0.0
    %185 = vmatpush1.msra.mxu0 0.0
    %186 = vmatprep.subr.mxu0 0.0
    %187 = vmatpush1.msra.mxu0 0.0
    %188 = vmatprep.subr.mxu0 0.0
    %189 = vmatpush1.msra.mxu0 0.0
    %190 = vmatprep.subr.mxu0 0.0
    %191 = vmatpush1.msra.mxu0 0.0
    %192 = vmatprep.subr.mxu0 0.0
    %193 = vmatpush1.msra.mxu0 0.0
    %194 = vmatprep.mubr.f32.mxu0 0.0
    %195 = vmatmul.mubr.f32.gmra.mrb[0].mxu0 %v103
    %v196 = vpop.f32.mrb[0].mxu0
    %v197 = vadd.f32 %v99, %v196
    %v198 = vpop.f32.mrb[0].mxu0
    %199 = vmatprep.mubr.f32.mxu0 0.0
    %200 = vmatmul.mubr.f32.gmra.mrb[0].mxu0 %v106
    %v201 = vpop.f32.mrb[0].mxu0
    %v202 = vadd.f32 %v99, %v201
    %v203 = vpop.f32.mrb[0].mxu0
    %204 = vmatprep.mubr.f32.mxu0 0.0
    %205 = vmatmul.mubr.f32.gmra.mrb[0].mxu0 %v109
    %v206 = vpop.f32.mrb[0].mxu0
    %v207 = vadd.f32 %v99, %v206
    %v208 = vpop.f32.mrb[0].mxu0
    %209 = vmatprep.mubr.f32.mxu0 0.0
    %210 = vmatmul.mubr.f32.gmra.mrb[0].mxu0 %v112
    %v211 = vpop.f32.mrb[0].mxu0
    %v212 = vadd.f32 %v99, %v211
    %v213 = vpop.f32.mrb[0].mxu0
    %214 = vmatprep.mubr.f32.mxu0 0.0
    %215 = vmatmul.mubr.f32.gmra.mrb[0].mxu0 %v115
    %v216 = vpop.f32.mrb[0].mxu0
    %v217 = vadd.f32 %v99, %v216
    %v218 = vpop.f32.mrb[0].mxu0
    %219 = vmatprep.mubr.f32.mxu0 0.0
    %220 = vmatmul.mubr.f32.gmra.mrb[0].mxu0 %v118
    %v221 = vpop.f32.mrb[0].mxu0
    %v222 = vadd.f32 %v99, %v221
    %v223 = vpop.f32.mrb[0].mxu0
    %224 = vmatprep.mubr.f32.mxu0 0.0
    %225 = vmatmul.mubr.f32.gmra.mrb[0].mxu0 %v121
    %v226 = vpop.f32.mrb[0].mxu0
    %v227 = vadd.f32 %v99, %v226
    %v228 = vpop.f32.mrb[0].mxu0
    %229 = vmatprep.mubr.f32.mxu0 0.0
    %230 = vmatmul.mubr.f32.gmra.mrb[0].mxu0 %v124
    %v231 = vpop.f32.mrb[0].mxu0
    %v232 = vadd.f32 %v99, %v231
    %v233 = vpop.f32.mrb[0].mxu0
    %234 = vdwg.mxu0
    %235 = vst [vmem:[#allocation2] sm:$0xff] %v197
    %236 = vst [vmem:[#allocation2 + $0x8] sm:$0xff] %v202
    %237 = vst [vmem:[#allocation2 + $0x10] sm:$0xff] %v207
    %238 = vst [vmem:[#allocation2 + $0x18] sm:$0xff] %v212
    %239 = vst [vmem:[#allocation2 + $0x20] sm:$0xff] %v217
    %240 = vst [vmem:[#allocation2 + $0x28] sm:$0xff] %v222
    %241 = vst [vmem:[#allocation2 + $0x30] sm:$0xff] %v227
    %242 = vst [vmem:[#allocation2 + $0x38] sm:$0xff] %v232
    %v243 = vld [vmem:[#allocation2] sm:$0xff]
    %v248 = vunpack.c.l.b16 %v64
    %v249 = vunpack.c.l.b16 %v65
    %v250 = vunpack.c.l.b16 %v66
    %v251 = vunpack.c.l.b16 %v67
    %v252 = vpack.c.b16 %v249, %v248
    %v253 = vpack.c.b16 %v251, %v250
    %vm256 = vcmask 261120
    %v258 = vsel %vm256, 0, 0
    %260 = vmatprep.subr.bf16.mxu0 0
    %261 = vmatpush1.bf16.msra.mxu0 %v252
    %262 = vmatprep.subr.bf16.mxu0 0
    %263 = vmatpush1.bf16.msra.mxu0 %v253
    %264 = vmatprep.subr.bf16.mxu0 0
    %265 = vmatpush1.bf16.msra.mxu0 0
    %266 = vmatprep.subr.bf16.mxu0 0
    %267 = vmatpush1.bf16.msra.mxu0 0
    %268 = vmatprep.subr.bf16.mxu0 0
    %269 = vmatpush1.bf16.msra.mxu0 0
    %270 = vmatprep.subr.bf16.mxu0 0
    %271 = vmatpush1.bf16.msra.mxu0 0
    %272 = vmatprep.subr.bf16.mxu0 0
    %273 = vmatpush1.bf16.msra.mxu0 0
    %274 = vmatprep.subr.bf16.mxu0 0
    %275 = vmatpush1.bf16.msra.mxu0 0
    %276 = vmatprep.subr.bf16.mxu0 0
    %277 = vmatpush1.bf16.msra.mxu0 0
    %278 = vmatprep.subr.bf16.mxu0 0
    %279 = vmatpush1.bf16.msra.mxu0 0
    %280 = vmatprep.subr.bf16.mxu0 0
    %281 = vmatpush1.bf16.msra.mxu0 0
    %282 = vmatprep.subr.bf16.mxu0 0
    %283 = vmatpush1.bf16.msra.mxu0 0
    %284 = vmatprep.subr.bf16.mxu0 0
    %285 = vmatpush1.bf16.msra.mxu0 0
    %286 = vmatprep.subr.bf16.mxu0 0
    %287 = vmatpush1.bf16.msra.mxu0 0
    %288 = vmatprep.subr.bf16.mxu0 0
    %289 = vmatpush1.bf16.msra.mxu0 0
    %290 = vmatprep.subr.bf16.mxu0 0
    %291 = vmatpush1.bf16.msra.mxu0 0
    %292 = vmatprep.mubr.bf16.mxu0 0
    %293 = vmatmul.mubr.bf16.gmra.mrb[0].mxu0 %v258
    %v294 = vpop.f32.mrb[0].mxu0
    %v295 = vadd.f32 0.0, %v294
    %v296 = vpop.f32.mrb[0].mxu0
    %v297 = vpop.f32.mrb[0].mxu0
    %v298 = vpop.f32.mrb[0].mxu0
    %299 = vdwg.mxu0
    %v300 = vadd.f32 %v243, %v295
    %v301 = vxor.u32 %v300, 2147483648
    %v302 = vmul.f32 %v301, 1.442695
    %v303 = vpow.pop %v302
    %v304 = vadd.f32 %v303, 1.0
    %v305 = vrcp.pop %v304
    %v306 = vmul.f32 1.0, %v305
    %v307 = vmul.f32 %v306, 2.0
    %v308 = vsub.f32 %v307, 1.0
    %v309 = vmul.f32 %v306, 0.0
    %311 = vrot.lane.b32.xlu0 %v308, 64
    %v312 = vpop.permute.xlu0 %311
    %v314 = vmul.f32 %v306, %v312
    %316 = vrot.lane.b32.xlu0 %v314, 32
    %v317 = vpop.permute.xlu0 %316
    %v319 = vadd.f32 %v309, %v317
    %v320 = vmul.f32 %v319, 2.0
    %v321 = vxor.u32 %v320, 2147483648
    %v322 = vmul.f32 %v321, 1.442695
    %v323 = vpow.pop %v322
    %v324 = vadd.f32 %v323, 1.0
    %v325 = vrcp.pop %v324
    %v326 = vmul.f32 1.0, %v325
    %v327 = vmul.f32 %v326, 2.0
    %v328 = vsub.f32 %v327, 1.0
    %330 = vrot.lane.b32.xlu0 %v328, 64
    %v331 = vpop.permute.xlu0 %330
    %v333 = vmul.f32 %v306, %v331
    %v334 = vld [vmem:[#allocation2 + $0x8] sm:$0xff]
    %v335 = vpack.c.bf16 %v333, %v333
    %337 = vrot.lane.b32.xlu0 %v335, 32
    %v338 = vpop.permute.xlu0 %337
    %v340 = vsel %vm256, %v338, 0
    %342 = vmatprep.subr.bf16.mxu0 0
    %343 = vmatpush1.bf16.msra.mxu0 %v252
    %344 = vmatprep.subr.bf16.mxu0 0
    %345 = vmatpush1.bf16.msra.mxu0 %v253
    %346 = vmatprep.subr.bf16.mxu0 0
    %347 = vmatpush1.bf16.msra.mxu0 0
    %348 = vmatprep.subr.bf16.mxu0 0
    %349 = vmatpush1.bf16.msra.mxu0 0
    %350 = vmatprep.subr.bf16.mxu0 0
    %351 = vmatpush1.bf16.msra.mxu0 0
    %352 = vmatprep.subr.bf16.mxu0 0
    %353 = vmatpush1.bf16.msra.mxu0 0
    %354 = vmatprep.subr.bf16.mxu0 0
    %355 = vmatpush1.bf16.msra.mxu0 0
    %356 = vmatprep.subr.bf16.mxu0 0
    %357 = vmatpush1.bf16.msra.mxu0 0
    %358 = vmatprep.subr.bf16.mxu0 0
    %359 = vmatpush1.bf16.msra.mxu0 0
    %360 = vmatprep.subr.bf16.mxu0 0
    %361 = vmatpush1.bf16.msra.mxu0 0
    %362 = vmatprep.subr.bf16.mxu0 0
    %363 = vmatpush1.bf16.msra.mxu0 0
    %364 = vmatprep.subr.bf16.mxu0 0
    %365 = vmatpush1.bf16.msra.mxu0 0
    %366 = vmatprep.subr.bf16.mxu0 0
    %367 = vmatpush1.bf16.msra.mxu0 0
    %368 = vmatprep.subr.bf16.mxu0 0
    %369 = vmatpush1.bf16.msra.mxu0 0
    %370 = vmatprep.subr.bf16.mxu0 0
    %371 = vmatpush1.bf16.msra.mxu0 0
    %372 = vmatprep.subr.bf16.mxu0 0
    %373 = vmatpush1.bf16.msra.mxu0 0
    %374 = vmatprep.mubr.bf16.mxu0 0
    %375 = vmatmul.mubr.bf16.gmra.mrb[0].mxu0 %v340
    %v376 = vpop.f32.mrb[0].mxu0
    %v377 = vadd.f32 0.0, %v376
    %v378 = vpop.f32.mrb[0].mxu0
    %v379 = vpop.f32.mrb[0].mxu0
    %v380 = vpop.f32.mrb[0].mxu0
    %381 = vdwg.mxu0
    %v382 = vadd.f32 %v334, %v377
    %v383 = vxor.u32 %v382, 2147483648
    %v384 = vmul.f32 %v383, 1.442695
    %v385 = vpow.pop %v384
    %v386 = vadd.f32 %v385, 1.0
    %v387 = vrcp.pop %v386
    %v388 = vmul.f32 1.0, %v387
    %v389 = vmul.f32 %v388, 2.0
    %v390 = vsub.f32 %v389, 1.0
    %v391 = vmul.f32 %v388, %v319
    %393 = vrot.lane.b32.xlu0 %v390, 64
    %v394 = vpop.permute.xlu0 %393
    %v396 = vmul.f32 %v388, %v394
    %398 = vrot.lane.b32.xlu0 %v396, 32
    %v399 = vpop.permute.xlu0 %398
    %v401 = vadd.f32 %v391, %v399
    %v402 = vmul.f32 %v401, 2.0
    %v403 = vxor.u32 %v402, 2147483648
    %v404 = vmul.f32 %v403, 1.442695
    %v405 = vpow.pop %v404
    %v406 = vadd.f32 %v405, 1.0
    %v407 = vrcp.pop %v406
    %v408 = vmul.f32 1.0, %v407
    %v409 = vmul.f32 %v408, 2.0
    %v410 = vsub.f32 %v409, 1.0
    %412 = vrot.lane.b32.xlu0 %v410, 64
    %v413 = vpop.permute.xlu0 %412
    %v415 = vmul.f32 %v388, %v413
    %v416 = vld [vmem:[#allocation2 + $0x10] sm:$0xff]
    %v417 = vpack.c.bf16 %v415, %v415
    %419 = vrot.lane.b32.xlu0 %v417, 32
    %v420 = vpop.permute.xlu0 %419
    %v422 = vsel %vm256, %v420, 0
    %424 = vmatprep.subr.bf16.mxu0 0
    %425 = vmatpush1.bf16.msra.mxu0 %v252
    %426 = vmatprep.subr.bf16.mxu0 0
    %427 = vmatpush1.bf16.msra.mxu0 %v253
    %428 = vmatprep.subr.bf16.mxu0 0
    %429 = vmatpush1.bf16.msra.mxu0 0
    %430 = vmatprep.subr.bf16.mxu0 0
    %431 = vmatpush1.bf16.msra.mxu0 0
    %432 = vmatprep.subr.bf16.mxu0 0
    %433 = vmatpush1.bf16.msra.mxu0 0
    %434 = vmatprep.subr.bf16.mxu0 0
    %435 = vmatpush1.bf16.msra.mxu0 0
    %436 = vmatprep.subr.bf16.mxu0 0
    %437 = vmatpush1.bf16.msra.mxu0 0
    %438 = vmatprep.subr.bf16.mxu0 0
    %439 = vmatpush1.bf16.msra.mxu0 0
    %440 = vmatprep.subr.bf16.mxu0 0
    %441 = vmatpush1.bf16.msra.mxu0 0
    %442 = vmatprep.subr.bf16.mxu0 0
    %443 = vmatpush1.bf16.msra.mxu0 0
    %444 = vmatprep.subr.bf16.mxu0 0
    %445 = vmatpush1.bf16.msra.mxu0 0
    %446 = vmatprep.subr.bf16.mxu0 0
    %447 = vmatpush1.bf16.msra.mxu0 0
    %448 = vmatprep.subr.bf16.mxu0 0
    %449 = vmatpush1.bf16.msra.mxu0 0
    %450 = vmatprep.subr.bf16.mxu0 0
    %451 = vmatpush1.bf16.msra.mxu0 0
    %452 = vmatprep.subr.bf16.mxu0 0
    %453 = vmatpush1.bf16.msra.mxu0 0
    %454 = vmatprep.subr.bf16.mxu0 0
    %455 = vmatpush1.bf16.msra.mxu0 0
    %456 = vmatprep.mubr.bf16.mxu0 0
    %457 = vmatmul.mubr.bf16.gmra.mrb[0].mxu0 %v422
    %v458 = vpop.f32.mrb[0].mxu0
    %v459 = vadd.f32 0.0, %v458
    %v460 = vpop.f32.mrb[0].mxu0
    %v461 = vpop.f32.mrb[0].mxu0
    %v462 = vpop.f32.mrb[0].mxu0
    %463 = vdwg.mxu0
    %v464 = vadd.f32 %v416, %v459
    %v465 = vxor.u32 %v464, 2147483648
    %v466 = vmul.f32 %v465, 1.442695
    %v467 = vpow.pop %v466
    %v468 = vadd.f32 %v467, 1.0
    %v469 = vrcp.pop %v468
    %v470 = vmul.f32 1.0, %v469
    %v471 = vmul.f32 %v470, 2.0
    %v472 = vsub.f32 %v471, 1.0
    %v473 = vmul.f32 %v470, %v401
    %475 = vrot.lane.b32.xlu0 %v472, 64
    %v476 = vpop.permute.xlu0 %475
    %v478 = vmul.f32 %v470, %v476
    %480 = vrot.lane.b32.xlu0 %v478, 32
    %v481 = vpop.permute.xlu0 %480
    %v483 = vadd.f32 %v473, %v481
    %v484 = vmul.f32 %v483, 2.0
    %v485 = vxor.u32 %v484, 2147483648
    %v486 = vmul.f32 %v485, 1.442695
    %v487 = vpow.pop %v486
    %v488 = vadd.f32 %v487, 1.0
    %v489 = vrcp.pop %v488
    %v490 = vmul.f32 1.0, %v489
    %v491 = vmul.f32 %v490, 2.0
    %v492 = vsub.f32 %v491, 1.0
    %494 = vrot.lane.b32.xlu0 %v492, 64
    %v495 = vpop.permute.xlu0 %494
    %v497 = vmul.f32 %v470, %v495
    %v498 = vld [vmem:[#allocation2 + $0x18] sm:$0xff]
    %v499 = vpack.c.bf16 %v497, %v497
    %501 = vrot.lane.b32.xlu0 %v499, 32
    %v502 = vpop.permute.xlu0 %501
    %v504 = vsel %vm256, %v502, 0
    %506 = vmatprep.subr.bf16.mxu0 0
    %507 = vmatpush1.bf16.msra.mxu0 %v252
    %508 = vmatprep.subr.bf16.mxu0 0
    %509 = vmatpush1.bf16.msra.mxu0 %v253
    %510 = vmatprep.subr.bf16.mxu0 0
    %511 = vmatpush1.bf16.msra.mxu0 0
    %512 = vmatprep.subr.bf16.mxu0 0
    %513 = vmatpush1.bf16.msra.mxu0 0
    %514 = vmatprep.subr.bf16.mxu0 0
    %515 = vmatpush1.bf16.msra.mxu0 0
    %516 = vmatprep.subr.bf16.mxu0 0
    %517 = vmatpush1.bf16.msra.mxu0 0
    %518 = vmatprep.subr.bf16.mxu0 0
    %519 = vmatpush1.bf16.msra.mxu0 0
    %520 = vmatprep.subr.bf16.mxu0 0
    %521 = vmatpush1.bf16.msra.mxu0 0
    %522 = vmatprep.subr.bf16.mxu0 0
    %523 = vmatpush1.bf16.msra.mxu0 0
    %524 = vmatprep.subr.bf16.mxu0 0
    %525 = vmatpush1.bf16.msra.mxu0 0
    %526 = vmatprep.subr.bf16.mxu0 0
    %527 = vmatpush1.bf16.msra.mxu0 0
    %528 = vmatprep.subr.bf16.mxu0 0
    %529 = vmatpush1.bf16.msra.mxu0 0
    %530 = vmatprep.subr.bf16.mxu0 0
    %531 = vmatpush1.bf16.msra.mxu0 0
    %532 = vmatprep.subr.bf16.mxu0 0
    %533 = vmatpush1.bf16.msra.mxu0 0
    %534 = vmatprep.subr.bf16.mxu0 0
    %535 = vmatpush1.bf16.msra.mxu0 0
    %536 = vmatprep.subr.bf16.mxu0 0
    %537 = vmatpush1.bf16.msra.mxu0 0
    %538 = vmatprep.mubr.bf16.mxu0 0
    %539 = vmatmul.mubr.bf16.gmra.mrb[0].mxu0 %v504
    %v540 = vpop.f32.mrb[0].mxu0
    %v541 = vadd.f32 0.0, %v540
    %v542 = vpop.f32.mrb[0].mxu0
    %v543 = vpop.f32.mrb[0].mxu0
    %v544 = vpop.f32.mrb[0].mxu0
    %545 = vdwg.mxu0
    %v546 = vadd.f32 %v498, %v541
    %v547 = vxor.u32 %v546, 2147483648
    %v548 = vmul.f32 %v547, 1.442695
    %v549 = vpow.pop %v548
    %v550 = vadd.f32 %v549, 1.0
    %v551 = vrcp.pop %v550
    %v552 = vmul.f32 1.0, %v551
    %v553 = vmul.f32 %v552, 2.0
    %v554 = vsub.f32 %v553, 1.0
    %v555 = vmul.f32 %v552, %v483
    %557 = vrot.lane.b32.xlu0 %v554, 64
    %v558 = vpop.permute.xlu0 %557
    %v560 = vmul.f32 %v552, %v558
    %562 = vrot.lane.b32.xlu0 %v560, 32
    %v563 = vpop.permute.xlu0 %562
    %v565 = vadd.f32 %v555, %v563
    %v566 = vmul.f32 %v565, 2.0
    %v567 = vxor.u32 %v566, 2147483648
    %v568 = vmul.f32 %v567, 1.442695
    %v569 = vpow.pop %v568
    %v570 = vadd.f32 %v569, 1.0
    %v571 = vrcp.pop %v570
    %v572 = vmul.f32 1.0, %v571
    %v573 = vmul.f32 %v572, 2.0
    %v574 = vsub.f32 %v573, 1.0
    %576 = vrot.lane.b32.xlu0 %v574, 64
    %v577 = vpop.permute.xlu0 %576
    %v579 = vmul.f32 %v552, %v577
    %v580 = vld [vmem:[#allocation2 + $0x20] sm:$0xff]
    %v581 = vpack.c.bf16 %v579, %v579
    %583 = vrot.lane.b32.xlu0 %v581, 32
    %v584 = vpop.permute.xlu0 %583
    %v586 = vsel %vm256, %v584, 0
    %588 = vmatprep.subr.bf16.mxu0 0
    %589 = vmatpush1.bf16.msra.mxu0 %v252
    %590 = vmatprep.subr.bf16.mxu0 0
    %591 = vmatpush1.bf16.msra.mxu0 %v253
    %592 = vmatprep.subr.bf16.mxu0 0
    %593 = vmatpush1.bf16.msra.mxu0 0
    %594 = vmatprep.subr.bf16.mxu0 0
    %595 = vmatpush1.bf16.msra.mxu0 0
    %596 = vmatprep.subr.bf16.mxu0 0
    %597 = vmatpush1.bf16.msra.mxu0 0
    %598 = vmatprep.subr.bf16.mxu0 0
    %599 = vmatpush1.bf16.msra.mxu0 0
    %600 = vmatprep.subr.bf16.mxu0 0
    %601 = vmatpush1.bf16.msra.mxu0 0
    %602 = vmatprep.subr.bf16.mxu0 0
    %603 = vmatpush1.bf16.msra.mxu0 0
    %604 = vmatprep.subr.bf16.mxu0 0
    %605 = vmatpush1.bf16.msra.mxu0 0
    %606 = vmatprep.subr.bf16.mxu0 0
    %607 = vmatpush1.bf16.msra.mxu0 0
    %608 = vmatprep.subr.bf16.mxu0 0
    %609 = vmatpush1.bf16.msra.mxu0 0
    %610 = vmatprep.subr.bf16.mxu0 0
    %611 = vmatpush1.bf16.msra.mxu0 0
    %612 = vmatprep.subr.bf16.mxu0 0
    %613 = vmatpush1.bf16.msra.mxu0 0
    %614 = vmatprep.subr.bf16.mxu0 0
    %615 = vmatpush1.bf16.msra.mxu0 0
    %616 = vmatprep.subr.bf16.mxu0 0
    %617 = vmatpush1.bf16.msra.mxu0 0
    %618 = vmatprep.subr.bf16.mxu0 0
    %619 = vmatpush1.bf16.msra.mxu0 0
    %620 = vmatprep.mubr.bf16.mxu0 0
    %621 = vmatmul.mubr.bf16.gmra.mrb[0].mxu0 %v586
    %v622 = vpop.f32.mrb[0].mxu0
    %v623 = vadd.f32 0.0, %v622
    %v624 = vpop.f32.mrb[0].mxu0
    %v625 = vpop.f32.mrb[0].mxu0
    %v626 = vpop.f32.mrb[0].mxu0
    %627 = vdwg.mxu0
    %v628 = vadd.f32 %v580, %v623
    %v629 = vxor.u32 %v628, 2147483648
    %v630 = vmul.f32 %v629, 1.442695
    %v631 = vpow.pop %v630
    %v632 = vadd.f32 %v631, 1.0
    %v633 = vrcp.pop %v632
    %v634 = vmul.f32 1.0, %v633
    %v635 = vmul.f32 %v634, 2.0
    %v636 = vsub.f32 %v635, 1.0
    %v637 = vmul.f32 %v634, %v565
    %639 = vrot.lane.b32.xlu0 %v636, 64
    %v640 = vpop.permute.xlu0 %639
    %v642 = vmul.f32 %v634, %v640
    %644 = vrot.lane.b32.xlu0 %v642, 32
    %v645 = vpop.permute.xlu0 %644
    %v647 = vadd.f32 %v637, %v645
    %v648 = vmul.f32 %v647, 2.0
    %v649 = vxor.u32 %v648, 2147483648
    %v650 = vmul.f32 %v649, 1.442695
    %v651 = vpow.pop %v650
    %v652 = vadd.f32 %v651, 1.0
    %v653 = vrcp.pop %v652
    %v654 = vmul.f32 1.0, %v653
    %v655 = vmul.f32 %v654, 2.0
    %v656 = vsub.f32 %v655, 1.0
    %658 = vrot.lane.b32.xlu0 %v656, 64
    %v659 = vpop.permute.xlu0 %658
    %v661 = vmul.f32 %v634, %v659
    %v662 = vld [vmem:[#allocation2 + $0x28] sm:$0xff]
    %v663 = vpack.c.bf16 %v661, %v661
    %665 = vrot.lane.b32.xlu0 %v663, 32
    %v666 = vpop.permute.xlu0 %665
    %v668 = vsel %vm256, %v666, 0
    %670 = vmatprep.subr.bf16.mxu0 0
    %671 = vmatpush1.bf16.msra.mxu0 %v252
    %672 = vmatprep.subr.bf16.mxu0 0
    %673 = vmatpush1.bf16.msra.mxu0 %v253
    %674 = vmatprep.subr.bf16.mxu0 0
    %675 = vmatpush1.bf16.msra.mxu0 0
    %676 = vmatprep.subr.bf16.mxu0 0
    %677 = vmatpush1.bf16.msra.mxu0 0
    %678 = vmatprep.subr.bf16.mxu0 0
    %679 = vmatpush1.bf16.msra.mxu0 0
    %680 = vmatprep.subr.bf16.mxu0 0
    %681 = vmatpush1.bf16.msra.mxu0 0
    %682 = vmatprep.subr.bf16.mxu0 0
    %683 = vmatpush1.bf16.msra.mxu0 0
    %684 = vmatprep.subr.bf16.mxu0 0
    %685 = vmatpush1.bf16.msra.mxu0 0
    %686 = vmatprep.subr.bf16.mxu0 0
    %687 = vmatpush1.bf16.msra.mxu0 0
    %688 = vmatprep.subr.bf16.mxu0 0
    %689 = vmatpush1.bf16.msra.mxu0 0
    %690 = vmatprep.subr.bf16.mxu0 0
    %691 = vmatpush1.bf16.msra.mxu0 0
    %692 = vmatprep.subr.bf16.mxu0 0
    %693 = vmatpush1.bf16.msra.mxu0 0
    %694 = vmatprep.subr.bf16.mxu0 0
    %695 = vmatpush1.bf16.msra.mxu0 0
    %696 = vmatprep.subr.bf16.mxu0 0
    %697 = vmatpush1.bf16.msra.mxu0 0
    %698 = vmatprep.subr.bf16.mxu0 0
    %699 = vmatpush1.bf16.msra.mxu0 0
    %700 = vmatprep.subr.bf16.mxu0 0
    %701 = vmatpush1.bf16.msra.mxu0 0
    %702 = vmatprep.mubr.bf16.mxu0 0
    %703 = vmatmul.mubr.bf16.gmra.mrb[0].mxu0 %v668
    %v704 = vpop.f32.mrb[0].mxu0
    %v705 = vadd.f32 0.0, %v704
    %v706 = vpop.f32.mrb[0].mxu0
    %v707 = vpop.f32.mrb[0].mxu0
    %v708 = vpop.f32.mrb[0].mxu0
    %709 = vdwg.mxu0
    %v710 = vadd.f32 %v662, %v705
    %v711 = vxor.u32 %v710, 2147483648
    %v712 = vmul.f32 %v711, 1.442695
    %v713 = vpow.pop %v712
    %v714 = vadd.f32 %v713, 1.0
    %v715 = vrcp.pop %v714
    %v716 = vmul.f32 1.0, %v715
    %v717 = vmul.f32 %v716, 2.0
    %v718 = vsub.f32 %v717, 1.0
    %v719 = vmul.f32 %v716, %v647
    %721 = vrot.lane.b32.xlu0 %v718, 64
    %v722 = vpop.permute.xlu0 %721
    %v724 = vmul.f32 %v716, %v722
    %726 = vrot.lane.b32.xlu0 %v724, 32
    %v727 = vpop.permute.xlu0 %726
    %v729 = vadd.f32 %v719, %v727
    %v730 = vmul.f32 %v729, 2.0
    %v731 = vxor.u32 %v730, 2147483648
    %v732 = vmul.f32 %v731, 1.442695
    %v733 = vpow.pop %v732
    %v734 = vadd.f32 %v733, 1.0
    %v735 = vrcp.pop %v734
    %v736 = vmul.f32 1.0, %v735
    %v737 = vmul.f32 %v736, 2.0
    %v738 = vsub.f32 %v737, 1.0
    %740 = vrot.lane.b32.xlu0 %v738, 64
    %v741 = vpop.permute.xlu0 %740
    %v743 = vmul.f32 %v716, %v741
    %v744 = vld [vmem:[#allocation2 + $0x30] sm:$0xff]
    %v745 = vpack.c.bf16 %v743, %v743
    %747 = vrot.lane.b32.xlu0 %v745, 32
    %v748 = vpop.permute.xlu0 %747
    %v750 = vsel %vm256, %v748, 0
    %752 = vmatprep.subr.bf16.mxu0 0
    %753 = vmatpush1.bf16.msra.mxu0 %v252
    %754 = vmatprep.subr.bf16.mxu0 0
    %755 = vmatpush1.bf16.msra.mxu0 %v253
    %756 = vmatprep.subr.bf16.mxu0 0
    %757 = vmatpush1.bf16.msra.mxu0 0
    %758 = vmatprep.subr.bf16.mxu0 0
    %759 = vmatpush1.bf16.msra.mxu0 0
    %760 = vmatprep.subr.bf16.mxu0 0
    %761 = vmatpush1.bf16.msra.mxu0 0
    %762 = vmatprep.subr.bf16.mxu0 0
    %763 = vmatpush1.bf16.msra.mxu0 0
    %764 = vmatprep.subr.bf16.mxu0 0
    %765 = vmatpush1.bf16.msra.mxu0 0
    %766 = vmatprep.subr.bf16.mxu0 0
    %767 = vmatpush1.bf16.msra.mxu0 0
    %768 = vmatprep.subr.bf16.mxu0 0
    %769 = vmatpush1.bf16.msra.mxu0 0
    %770 = vmatprep.subr.bf16.mxu0 0
    %771 = vmatpush1.bf16.msra.mxu0 0
    %772 = vmatprep.subr.bf16.mxu0 0
    %773 = vmatpush1.bf16.msra.mxu0 0
    %774 = vmatprep.subr.bf16.mxu0 0
    %775 = vmatpush1.bf16.msra.mxu0 0
    %776 = vmatprep.subr.bf16.mxu0 0
    %777 = vmatpush1.bf16.msra.mxu0 0
    %778 = vmatprep.subr.bf16.mxu0 0
    %779 = vmatpush1.bf16.msra.mxu0 0
    %780 = vmatprep.subr.bf16.mxu0 0
    %781 = vmatpush1.bf16.msra.mxu0 0
    %782 = vmatprep.subr.bf16.mxu0 0
    %783 = vmatpush1.bf16.msra.mxu0 0
    %784 = vmatprep.mubr.bf16.mxu0 0
    %785 = vmatmul.mubr.bf16.gmra.mrb[0].mxu0 %v750
    %v786 = vpop.f32.mrb[0].mxu0
    %v787 = vadd.f32 0.0, %v786
    %v788 = vpop.f32.mrb[0].mxu0
    %v789 = vpop.f32.mrb[0].mxu0
    %v790 = vpop.f32.mrb[0].mxu0
    %791 = vdwg.mxu0
    %v792 = vadd.f32 %v744, %v787
    %v793 = vxor.u32 %v792, 2147483648
    %v794 = vmul.f32 %v793, 1.442695
    %v795 = vpow.pop %v794
    %v796 = vadd.f32 %v795, 1.0
    %v797 = vrcp.pop %v796
    %v798 = vmul.f32 1.0, %v797
    %v799 = vmul.f32 %v798, 2.0
    %v800 = vsub.f32 %v799, 1.0
    %v801 = vmul.f32 %v798, %v729
    %803 = vrot.lane.b32.xlu0 %v800, 64
    %v804 = vpop.permute.xlu0 %803
    %v806 = vmul.f32 %v798, %v804
    %808 = vrot.lane.b32.xlu0 %v806, 32
    %v809 = vpop.permute.xlu0 %808
    %v811 = vadd.f32 %v801, %v809
    %v812 = vmul.f32 %v811, 2.0
    %v813 = vxor.u32 %v812, 2147483648
    %v814 = vmul.f32 %v813, 1.442695
    %v815 = vpow.pop %v814
    %v816 = vadd.f32 %v815, 1.0
    %v817 = vrcp.pop %v816
    %v818 = vmul.f32 1.0, %v817
    %v819 = vmul.f32 %v818, 2.0
    %v820 = vsub.f32 %v819, 1.0
    %822 = vrot.lane.b32.xlu0 %v820, 64
    %v823 = vpop.permute.xlu0 %822
    %v825 = vmul.f32 %v798, %v823
    %v826 = vld [vmem:[#allocation2 + $0x38] sm:$0xff]
    %v827 = vpack.c.bf16 %v825, %v825
    %829 = vrot.lane.b32.xlu0 %v827, 32
    %v830 = vpop.permute.xlu0 %829
    %v832 = vsel %vm256, %v830, 0
    %834 = vmatprep.subr.bf16.mxu0 0
    %835 = vmatpush1.bf16.msra.mxu0 %v252
    %836 = vmatprep.subr.bf16.mxu0 0
    %837 = vmatpush1.bf16.msra.mxu0 %v253
    %838 = vmatprep.subr.bf16.mxu0 0
    %839 = vmatpush1.bf16.msra.mxu0 0
    %840 = vmatprep.subr.bf16.mxu0 0
    %841 = vmatpush1.bf16.msra.mxu0 0
    %842 = vmatprep.subr.bf16.mxu0 0
    %843 = vmatpush1.bf16.msra.mxu0 0
    %844 = vmatprep.subr.bf16.mxu0 0
    %845 = vmatpush1.bf16.msra.mxu0 0
    %846 = vmatprep.subr.bf16.mxu0 0
    %847 = vmatpush1.bf16.msra.mxu0 0
    %848 = vmatprep.subr.bf16.mxu0 0
    %849 = vmatpush1.bf16.msra.mxu0 0
    %850 = vmatprep.subr.bf16.mxu0 0
    %851 = vmatpush1.bf16.msra.mxu0 0
    %852 = vmatprep.subr.bf16.mxu0 0
    %853 = vmatpush1.bf16.msra.mxu0 0
    %854 = vmatprep.subr.bf16.mxu0 0
    %855 = vmatpush1.bf16.msra.mxu0 0
    %856 = vmatprep.subr.bf16.mxu0 0
    %857 = vmatpush1.bf16.msra.mxu0 0
    %858 = vmatprep.subr.bf16.mxu0 0
    %859 = vmatpush1.bf16.msra.mxu0 0
    %860 = vmatprep.subr.bf16.mxu0 0
    %861 = vmatpush1.bf16.msra.mxu0 0
    %862 = vmatprep.subr.bf16.mxu0 0
    %863 = vmatpush1.bf16.msra.mxu0 0
    %864 = vmatprep.subr.bf16.mxu0 0
    %865 = vmatpush1.bf16.msra.mxu0 0
    %866 = vmatprep.mubr.bf16.mxu0 0
    %867 = vmatmul.mubr.bf16.gmra.mrb[0].mxu0 %v832
    %v868 = vpop.f32.mrb[0].mxu0
    %v869 = vadd.f32 0.0, %v868
    %v870 = vpop.f32.mrb[0].mxu0
    %v871 = vpop.f32.mrb[0].mxu0
    %v872 = vpop.f32.mrb[0].mxu0
    %873 = vdwg.mxu0
    %v874 = vadd.f32 %v826, %v869
    %v875 = vxor.u32 %v874, 2147483648
    %v876 = vmul.f32 %v875, 1.442695
    %v877 = vpow.pop %v876
    %v878 = vadd.f32 %v877, 1.0
    %v879 = vrcp.pop %v878
    %v880 = vmul.f32 1.0, %v879
    %v881 = vmul.f32 %v880, 2.0
    %v882 = vsub.f32 %v881, 1.0
    %v883 = vmul.f32 %v880, %v811
    %885 = vrot.lane.b32.xlu0 %v882, 64
    %v886 = vpop.permute.xlu0 %885
    %v888 = vmul.f32 %v880, %v886
    %890 = vrot.lane.b32.xlu0 %v888, 32
    %v891 = vpop.permute.xlu0 %890
    %v893 = vadd.f32 %v883, %v891
    %v894 = vmul.f32 %v893, 2.0
    %v895 = vxor.u32 %v894, 2147483648
    %v896 = vmul.f32 %v895, 1.442695
    %v897 = vpow.pop %v896
    %v898 = vadd.f32 %v897, 1.0
    %v899 = vrcp.pop %v898
    %v900 = vmul.f32 1.0, %v899
    %v901 = vmul.f32 %v900, 2.0
    %v902 = vsub.f32 %v901, 1.0
    %904 = vrot.lane.b32.xlu0 %v902, 64
    %v905 = vpop.permute.xlu0 %904
    %v907 = vmul.f32 %v880, %v905
    %v908 = vld [vmem:[%s0 + $0x38] sm:$0xff]
    %v909 = vpack.c.bf16 %v908, %v908
    %v910 = vpack.c.bf16 %v907, %v907
    %912 = vrot.lane.b32.xlu0 %v910, 32
    %v913 = vpop.permute.xlu0 %912
    %v918 = vunpack.c.l.b16 %v69
    %v919 = vunpack.c.l.b16 %v70
    %v920 = vunpack.c.l.b16 %v71
    %v921 = vunpack.c.l.b16 %v72
    %v922 = vpack.c.b16 %v919, %v918
    %v923 = vpack.c.b16 %v921, %v920
    %v927 = vsel %vm256, %v913, 0
    %929 = vmatprep.subr.bf16.mxu0 0
    %930 = vmatpush1.bf16.msra.mxu0 %v922
    %931 = vmatprep.subr.bf16.mxu0 0
    %932 = vmatpush1.bf16.msra.mxu0 %v923
    %933 = vmatprep.subr.bf16.mxu0 0
    %934 = vmatpush1.bf16.msra.mxu0 0
    %935 = vmatprep.subr.bf16.mxu0 0
    %936 = vmatpush1.bf16.msra.mxu0 0
    %937 = vmatprep.subr.bf16.mxu0 0
    %938 = vmatpush1.bf16.msra.mxu0 0
    %939 = vmatprep.subr.bf16.mxu0 0
    %940 = vmatpush1.bf16.msra.mxu0 0
    %941 = vmatprep.subr.bf16.mxu0 0
    %942 = vmatpush1.bf16.msra.mxu0 0
    %943 = vmatprep.subr.bf16.mxu0 0
    %944 = vmatpush1.bf16.msra.mxu0 0
    %945 = vmatprep.subr.bf16.mxu0 0
    %946 = vmatpush1.bf16.msra.mxu0 0
    %947 = vmatprep.subr.bf16.mxu0 0
    %948 = vmatpush1.bf16.msra.mxu0 0
    %949 = vmatprep.subr.bf16.mxu0 0
    %950 = vmatpush1.bf16.msra.mxu0 0
    %951 = vmatprep.subr.bf16.mxu0 0
    %952 = vmatpush1.bf16.msra.mxu0 0
    %953 = vmatprep.subr.bf16.mxu0 0
    %954 = vmatpush1.bf16.msra.mxu0 0
    %955 = vmatprep.subr.bf16.mxu0 0
    %956 = vmatpush1.bf16.msra.mxu0 0
    %957 = vmatprep.subr.bf16.mxu0 0
    %958 = vmatpush1.bf16.msra.mxu0 0
    %959 = vmatprep.subr.bf16.mxu0 0
    %960 = vmatpush1.bf16.msra.mxu0 0
    %961 = vmatprep.mubr.bf16.mxu0 0
    %962 = vmatmul.mubr.bf16.gmra.mrb[0].mxu0 %v927
    %v963 = vpop.f32.mrb[0].mxu0
    %v964 = vadd.f32 0.0, %v963
    %v965 = vpop.f32.mrb[0].mxu0
    %v966 = vpop.f32.mrb[0].mxu0
    %v967 = vpop.f32.mrb[0].mxu0
    %968 = vdwg.mxu0
    %v970 = vsel %vm101, %v909, 0
    %vm972 = vcmask 1040384
    %v974 = vsel %vm972, %v68, 0
    %976 = vmatprep.subr.bf16.mxu0 0
    %977 = vmatpush1.bf16.msra.mxu0 %v974
    %978 = vmatprep.subr.bf16.mxu0 0
    %979 = vmatpush1.bf16.msra.mxu0 0
    %980 = vmatprep.subr.bf16.mxu0 0
    %981 = vmatpush1.bf16.msra.mxu0 0
    %982 = vmatprep.subr.bf16.mxu0 0
    %983 = vmatpush1.bf16.msra.mxu0 0
    %984 = vmatprep.subr.bf16.mxu0 0
    %985 = vmatpush1.bf16.msra.mxu0 0
    %986 = vmatprep.subr.bf16.mxu0 0
    %987 = vmatpush1.bf16.msra.mxu0 0
    %988 = vmatprep.subr.bf16.mxu0 0
    %989 = vmatpush1.bf16.msra.mxu0 0
    %990 = vmatprep.subr.bf16.mxu0 0
    %991 = vmatpush1.bf16.msra.mxu0 0
    %992 = vmatprep.subr.bf16.mxu0 0
    %993 = vmatpush1.bf16.msra.mxu0 0
    %994 = vmatprep.subr.bf16.mxu0 0
    %995 = vmatpush1.bf16.msra.mxu0 0
    %996 = vmatprep.subr.bf16.mxu0 0
    %997 = vmatpush1.bf16.msra.mxu0 0
    %998 = vmatprep.subr.bf16.mxu0 0
    %999 = vmatpush1.bf16.msra.mxu0 0
    %1000 = vmatprep.subr.bf16.mxu0 0
    %1001 = vmatpush1.bf16.msra.mxu0 0
    %1002 = vmatprep.subr.bf16.mxu0 0
    %1003 = vmatpush1.bf16.msra.mxu0 0
    %1004 = vmatprep.subr.bf16.mxu0 0
    %1005 = vmatpush1.bf16.msra.mxu0 0
    %1006 = vmatprep.subr.bf16.mxu0 0
    %1007 = vmatpush1.bf16.msra.mxu0 0
    %1008 = vmatprep.mubr.bf16.mxu0 0
    %1009 = vmatmul.mubr.bf16.gmra.mrb[0].mxu0 %v970
    %v1010 = vpop.f32.mrb[0].mxu0
    %v1011 = vadd.f32 %v964, %v1010
    %v1012 = vpop.f32.mrb[0].mxu0
    %v1013 = vpop.f32.mrb[0].mxu0
    %v1014 = vpop.f32.mrb[0].mxu0
    %1015 = vdwg.mxu0
    %v1017 = vlaneseq
    %v1018 = vshrl.u32 %v1017, 7
    %v1019 = vsub.s32 0, %v1018
    %v1020 = vrot.slane %v77, %v1019
    %v1022 = vadd.f32 %v1011, %v1020
    %v1023 = vxor.u32 %v1022, 2147483648
    %v1024 = vmul.f32 %v1023, 1.442695
    %v1025 = vpow.pop %v1024
    %v1026 = vadd.f32 %v1025, 1.0
    %v1027 = vrcp.pop %v1026
    %v1028 = vmul.f32 1.0, %v1027
    %v1029 = vmul.f32 %v1028, 2.0
    %v1030 = vsub.f32 %v1029, 1.0
    %v1031 = vmul.f32 %v1028, %v893
    %1033 = vrot.lane.b32.xlu0 %v1030, 64
    %v1034 = vpop.permute.xlu0 %1033
    %v1036 = vmul.f32 %v1028, %v1034
    %1038 = vrot.lane.b32.xlu0 %v1036, 32
    %v1039 = vpop.permute.xlu0 %1038
    %v1041 = vadd.f32 %v1031, %v1039
    %v1042 = vmul.f32 %v1041, 2.0
    %v1043 = vxor.u32 %v1042, 2147483648
    %v1044 = vmul.f32 %v1043, 1.442695
    %v1045 = vpow.pop %v1044
    %v1046 = vadd.f32 %v1045, 1.0
    %v1047 = vrcp.pop %v1046
    %v1048 = vmul.f32 1.0, %v1047
    %v1049 = vmul.f32 %v1048, 2.0
    %v1050 = vsub.f32 %v1049, 1.0
    %1052 = vrot.lane.b32.xlu0 %v1050, 64
    %v1053 = vpop.permute.xlu0 %1052
    %v1055 = vmul.f32 %v1028, %v1053
    %1057 = vrot.lane.b32.xlu0 %v1055, 32
    %v1058 = vpop.permute.xlu0 %1057
    %1060 = vst.msk [vmem:[#allocation3] sm:$0xff] %vm256, %v1058
    %v1061 = vpack.c.bf16 %v1055, %v1055
    %1063 = vrot.lane.b32.xlu0 %v1061, 32
    %v1064 = vpop.permute.xlu0 %1063
    %v1069 = vunpack.c.l.b16 %v73
    %v1070 = vunpack.c.l.b16 %v74
    %v1071 = vunpack.c.l.b16 %v75
    %v1072 = vunpack.c.l.b16 %v76
    %v1073 = vpack.c.b16 %v1070, %v1069
    %v1074 = vpack.c.b16 %v1072, %v1071
    %v1078 = vsel %vm256, %v1064, 0
    %1080 = vmatprep.subr.bf16.mxu0 0
    %1081 = vmatpush1.bf16.msra.mxu0 %v1073
    %1082 = vmatprep.subr.bf16.mxu0 0
    %1083 = vmatpush1.bf16.msra.mxu0 %v1074
    %1084 = vmatprep.subr.bf16.mxu0 0
    %1085 = vmatpush1.bf16.msra.mxu0 0
    %1086 = vmatprep.subr.bf16.mxu0 0
    %1087 = vmatpush1.bf16.msra.mxu0 0
    %1088 = vmatprep.subr.bf16.mxu0 0
    %1089 = vmatpush1.bf16.msra.mxu0 0
    %1090 = vmatprep.subr.bf16.mxu0 0
    %1091 = vmatpush1.bf16.msra.mxu0 0
    %1092 = vmatprep.subr.bf16.mxu0 0
    %1093 = vmatpush1.bf16.msra.mxu0 0
    %1094 = vmatprep.subr.bf16.mxu0 0
    %1095 = vmatpush1.bf16.msra.mxu0 0
    %1096 = vmatprep.subr.bf16.mxu0 0
    %1097 = vmatpush1.bf16.msra.mxu0 0
    %1098 = vmatprep.subr.bf16.mxu0 0
    %1099 = vmatpush1.bf16.msra.mxu0 0
    %1100 = vmatprep.subr.bf16.mxu0 0
    %1101 = vmatpush1.bf16.msra.mxu0 0
    %1102 = vmatprep.subr.bf16.mxu0 0
    %1103 = vmatpush1.bf16.msra.mxu0 0
    %1104 = vmatprep.subr.bf16.mxu0 0
    %1105 = vmatpush1.bf16.msra.mxu0 0
    %1106 = vmatprep.subr.bf16.mxu0 0
    %1107 = vmatpush1.bf16.msra.mxu0 0
    %1108 = vmatprep.subr.bf16.mxu0 0
    %1109 = vmatpush1.bf16.msra.mxu0 0
    %1110 = vmatprep.subr.bf16.mxu0 0
    %1111 = vmatpush1.bf16.msra.mxu0 0
    %1112 = vmatprep.mubr.bf16.mxu0 0
    %1113 = vmatmul.mubr.bf16.gmra.mrb[0].mxu0 %v1078
    %v1114 = vpop.f32.mrb[0].mxu0
    %v1115 = vadd.f32 %v83, %v1114
    %v1116 = vpop.f32.mrb[0].mxu0
    %v1117 = vpop.f32.mrb[0].mxu0
    %v1118 = vpop.f32.mrb[0].mxu0
    %1119 = vdwg.mxu0
    %v1120 = vxor.u32 %v1115, 2147483648
    %v1121 = vmul.f32 %v1120, 1.442695
    %v1122 = vpow.pop %v1121
    %v1123 = vadd.f32 %v1122, 1.0
    %v1124 = vrcp.pop %v1123
    %v1125 = vmul.f32 1.0, %v1124
    %v1126 = vmul.f32 %v1125, 2.0
    %v1127 = vsub.f32 %v1126, 1.0
    %v1128 = vmul.f32 %v1125, %v1041
    %1130 = vrot.lane.b32.xlu0 %v1127, 64
    %v1131 = vpop.permute.xlu0 %1130
    %v1133 = vmul.f32 %v1125, %v1131
    %1135 = vrot.lane.b32.xlu0 %v1133, 32
    %v1136 = vpop.permute.xlu0 %1135
    %v1138 = vadd.f32 %v1128, %v1136
    %v1139 = vmul.f32 %v1138, 2.0
    %v1140 = vxor.u32 %v1139, 2147483648
    %v1141 = vmul.f32 %v1140, 1.442695
    %v1142 = vpow.pop %v1141
    %v1143 = vadd.f32 %v1142, 1.0
    %v1144 = vrcp.pop %v1143
    %v1145 = vmul.f32 1.0, %v1144
    %v1146 = vmul.f32 %v1145, 2.0
    %v1147 = vsub.f32 %v1146, 1.0
    %1149 = vrot.lane.b32.xlu0 %v1147, 64
    %v1150 = vpop.permute.xlu0 %1149
    %v1152 = vmul.f32 %v1125, %v1150
    %1154 = vrot.lane.b32.xlu0 %v1152, 32
    %v1155 = vpop.permute.xlu0 %1154
    %1157 = vst.msk [vmem:[#allocation3 + $0x8] sm:$0xff] %vm256, %v1155
    %v1158 = vpack.c.bf16 %v1152, %v1152
    %1160 = vrot.lane.b32.xlu0 %v1158, 32
    %v1161 = vpop.permute.xlu0 %1160
    %v1163 = vsel %vm256, %v1161, 0
    %1165 = vmatprep.subr.bf16.mxu0 0
    %1166 = vmatpush1.bf16.msra.mxu0 %v1073
    %1167 = vmatprep.subr.bf16.mxu0 0
    %1168 = vmatpush1.bf16.msra.mxu0 %v1074
    %1169 = vmatprep.subr.bf16.mxu0 0
    %1170 = vmatpush1.bf16.msra.mxu0 0
    %1171 = vmatprep.subr.bf16.mxu0 0
    %1172 = vmatpush1.bf16.msra.mxu0 0
    %1173 = vmatprep.subr.bf16.mxu0 0
    %1174 = vmatpush1.bf16.msra.mxu0 0
    %1175 = vmatprep.subr.bf16.mxu0 0
    %1176 = vmatpush1.bf16.msra.mxu0 0
    %1177 = vmatprep.subr.bf16.mxu0 0
    %1178 = vmatpush1.bf16.msra.mxu0 0
    %1179 = vmatprep.subr.bf16.mxu0 0
    %1180 = vmatpush1.bf16.msra.mxu0 0
    %1181 = vmatprep.subr.bf16.mxu0 0
    %1182 = vmatpush1.bf16.msra.mxu0 0
    %1183 = vmatprep.subr.bf16.mxu0 0
    %1184 = vmatpush1.bf16.msra.mxu0 0
    %1185 = vmatprep.subr.bf16.mxu0 0
    %1186 = vmatpush1.bf16.msra.mxu0 0
    %1187 = vmatprep.subr.bf16.mxu0 0
    %1188 = vmatpush1.bf16.msra.mxu0 0
    %1189 = vmatprep.subr.bf16.mxu0 0
    %1190 = vmatpush1.bf16.msra.mxu0 0
    %1191 = vmatprep.subr.bf16.mxu0 0
    %1192 = vmatpush1.bf16.msra.mxu0 0
    %1193 = vmatprep.subr.bf16.mxu0 0
    %1194 = vmatpush1.bf16.msra.mxu0 0
    %1195 = vmatprep.subr.bf16.mxu0 0
    %1196 = vmatpush1.bf16.msra.mxu0 0
    %1197 = vmatprep.mubr.bf16.mxu0 0
    %1198 = vmatmul.mubr.bf16.gmra.mrb[0].mxu0 %v1163
    %v1199 = vpop.f32.mrb[0].mxu0
    %v1200 = vadd.f32 %v83, %v1199
    %v1201 = vpop.f32.mrb[0].mxu0
    %v1202 = vpop.f32.mrb[0].mxu0
    %v1203 = vpop.f32.mrb[0].mxu0
    %1204 = vdwg.mxu0
    %v1205 = vxor.u32 %v1200, 2147483648
    %v1206 = vmul.f32 %v1205, 1.442695
    %v1207 = vpow.pop %v1206
    %v1208 = vadd.f32 %v1207, 1.0
    %v1209 = vrcp.pop %v1208
    %v1210 = vmul.f32 1.0, %v1209
    %v1211 = vmul.f32 %v1210, 2.0
    %v1212 = vsub.f32 %v1211, 1.0
    %v1213 = vmul.f32 %v1210, %v1138
    %1215 = vrot.lane.b32.xlu0 %v1212, 64
    %v1216 = vpop.permute.xlu0 %1215
    %v1218 = vmul.f32 %v1210, %v1216
    %1220 = vrot.lane.b32.xlu0 %v1218, 32
    %v1221 = vpop.permute.xlu0 %1220
    %v1223 = vadd.f32 %v1213, %v1221
    %v1224 = vmul.f32 %v1223, 2.0
    %v1225 = vxor.u32 %v1224, 2147483648
    %v1226 = vmul.f32 %v1225, 1.442695
    %v1227 = vpow.pop %v1226
    %v1228 = vadd.f32 %v1227, 1.0
    %v1229 = vrcp.pop %v1228
    %v1230 = vmul.f32 1.0, %v1229
    %v1231 = vmul.f32 %v1230, 2.0
    %v1232 = vsub.f32 %v1231, 1.0
    %1234 = vrot.lane.b32.xlu0 %v1232, 64
    %v1235 = vpop.permute.xlu0 %1234
    %v1237 = vmul.f32 %v1210, %v1235
    %1239 = vrot.lane.b32.xlu0 %v1237, 32
    %v1240 = vpop.permute.xlu0 %1239
    %1242 = vst.msk [vmem:[#allocation3 + $0x10] sm:$0xff] %vm256, %v1240
    %v1243 = vpack.c.bf16 %v1237, %v1237
    %1245 = vrot.lane.b32.xlu0 %v1243, 32
    %v1246 = vpop.permute.xlu0 %1245
    %v1248 = vsel %vm256, %v1246, 0
    %1250 = vmatprep.subr.bf16.mxu0 0
    %1251 = vmatpush1.bf16.msra.mxu0 %v1073
    %1252 = vmatprep.subr.bf16.mxu0 0
    %1253 = vmatpush1.bf16.msra.mxu0 %v1074
    %1254 = vmatprep.subr.bf16.mxu0 0
    %1255 = vmatpush1.bf16.msra.mxu0 0
    %1256 = vmatprep.subr.bf16.mxu0 0
    %1257 = vmatpush1.bf16.msra.mxu0 0
    %1258 = vmatprep.subr.bf16.mxu0 0
    %1259 = vmatpush1.bf16.msra.mxu0 0
    %1260 = vmatprep.subr.bf16.mxu0 0
    %1261 = vmatpush1.bf16.msra.mxu0 0
    %1262 = vmatprep.subr.bf16.mxu0 0
    %1263 = vmatpush1.bf16.msra.mxu0 0
    %1264 = vmatprep.subr.bf16.mxu0 0
    %1265 = vmatpush1.bf16.msra.mxu0 0
    %1266 = vmatprep.subr.bf16.mxu0 0
    %1267 = vmatpush1.bf16.msra.mxu0 0
    %1268 = vmatprep.subr.bf16.mxu0 0
    %1269 = vmatpush1.bf16.msra.mxu0 0
    %1270 = vmatprep.subr.bf16.mxu0 0
    %1271 = vmatpush1.bf16.msra.mxu0 0
    %1272 = vmatprep.subr.bf16.mxu0 0
    %1273 = vmatpush1.bf16.msra.mxu0 0
    %1274 = vmatprep.subr.bf16.mxu0 0
    %1275 = vmatpush1.bf16.msra.mxu0 0
    %1276 = vmatprep.subr.bf16.mxu0 0
    %1277 = vmatpush1.bf16.msra.mxu0 0
    %1278 = vmatprep.subr.bf16.mxu0 0
    %1279 = vmatpush1.bf16.msra.mxu0 0
    %1280 = vmatprep.subr.bf16.mxu0 0
    %1281 = vmatpush1.bf16.msra.mxu0 0
    %1282 = vmatprep.mubr.bf16.mxu0 0
    %1283 = vmatmul.mubr.bf16.gmra.mrb[0].mxu0 %v1248
    %v1284 = vpop.f32.mrb[0].mxu0
    %v1285 = vadd.f32 %v83, %v1284
    %v1286 = vpop.f32.mrb[0].mxu0
    %v1287 = vpop.f32.mrb[0].mxu0
    %v1288 = vpop.f32.mrb[0].mxu0
    %1289 = vdwg.mxu0
    %v1290 = vxor.u32 %v1285, 2147483648
    %v1291 = vmul.f32 %v1290, 1.442695
    %v1292 = vpow.pop %v1291
    %v1293 = vadd.f32 %v1292, 1.0
    %v1294 = vrcp.pop %v1293
    %v1295 = vmul.f32 1.0, %v1294
    %v1296 = vmul.f32 %v1295, 2.0
    %v1297 = vsub.f32 %v1296, 1.0
    %v1298 = vmul.f32 %v1295, %v1223
    %1300 = vrot.lane.b32.xlu0 %v1297, 64
    %v1301 = vpop.permute.xlu0 %1300
    %v1303 = vmul.f32 %v1295, %v1301
    %1305 = vrot.lane.b32.xlu0 %v1303, 32
    %v1306 = vpop.permute.xlu0 %1305
    %v1308 = vadd.f32 %v1298, %v1306
    %v1309 = vmul.f32 %v1308, 2.0
    %v1310 = vxor.u32 %v1309, 2147483648
    %v1311 = vmul.f32 %v1310, 1.442695
    %v1312 = vpow.pop %v1311
    %v1313 = vadd.f32 %v1312, 1.0
    %v1314 = vrcp.pop %v1313
    %v1315 = vmul.f32 1.0, %v1314
    %v1316 = vmul.f32 %v1315, 2.0
    %v1317 = vsub.f32 %v1316, 1.0
    %1319 = vrot.lane.b32.xlu0 %v1317, 64
    %v1320 = vpop.permute.xlu0 %1319
    %v1322 = vmul.f32 %v1295, %v1320
    %1324 = vrot.lane.b32.xlu0 %v1322, 32
    %v1325 = vpop.permute.xlu0 %1324
    %1327 = vst.msk [vmem:[#allocation3 + $0x18] sm:$0xff] %vm256, %v1325
    %v1328 = vpack.c.bf16 %v1322, %v1322
    %1330 = vrot.lane.b32.xlu0 %v1328, 32
    %v1331 = vpop.permute.xlu0 %1330
    %v1333 = vsel %vm256, %v1331, 0
    %1335 = vmatprep.subr.bf16.mxu0 0
    %1336 = vmatpush1.bf16.msra.mxu0 %v1073
    %1337 = vmatprep.subr.bf16.mxu0 0
    %1338 = vmatpush1.bf16.msra.mxu0 %v1074
    %1339 = vmatprep.subr.bf16.mxu0 0
    %1340 = vmatpush1.bf16.msra.mxu0 0
    %1341 = vmatprep.subr.bf16.mxu0 0
    %1342 = vmatpush1.bf16.msra.mxu0 0
    %1343 = vmatprep.subr.bf16.mxu0 0
    %1344 = vmatpush1.bf16.msra.mxu0 0
    %1345 = vmatprep.subr.bf16.mxu0 0
    %1346 = vmatpush1.bf16.msra.mxu0 0
    %1347 = vmatprep.subr.bf16.mxu0 0
    %1348 = vmatpush1.bf16.msra.mxu0 0
    %1349 = vmatprep.subr.bf16.mxu0 0
    %1350 = vmatpush1.bf16.msra.mxu0 0
    %1351 = vmatprep.subr.bf16.mxu0 0
    %1352 = vmatpush1.bf16.msra.mxu0 0
    %1353 = vmatprep.subr.bf16.mxu0 0
    %1354 = vmatpush1.bf16.msra.mxu0 0
    %1355 = vmatprep.subr.bf16.mxu0 0
    %1356 = vmatpush1.bf16.msra.mxu0 0
    %1357 = vmatprep.subr.bf16.mxu0 0
    %1358 = vmatpush1.bf16.msra.mxu0 0
    %1359 = vmatprep.subr.bf16.mxu0 0
    %1360 = vmatpush1.bf16.msra.mxu0 0
    %1361 = vmatprep.subr.bf16.mxu0 0
    %1362 = vmatpush1.bf16.msra.mxu0 0
    %1363 = vmatprep.subr.bf16.mxu0 0
    %1364 = vmatpush1.bf16.msra.mxu0 0
    %1365 = vmatprep.subr.bf16.mxu0 0
    %1366 = vmatpush1.bf16.msra.mxu0 0
    %1367 = vmatprep.mubr.bf16.mxu0 0
    %1368 = vmatmul.mubr.bf16.gmra.mrb[0].mxu0 %v1333
    %v1369 = vpop.f32.mrb[0].mxu0
    %v1370 = vadd.f32 %v83, %v1369
    %v1371 = vpop.f32.mrb[0].mxu0
    %v1372 = vpop.f32.mrb[0].mxu0
    %v1373 = vpop.f32.mrb[0].mxu0
    %1374 = vdwg.mxu0
    %v1375 = vxor.u32 %v1370, 2147483648
    %v1376 = vmul.f32 %v1375, 1.442695
    %v1377 = vpow.pop %v1376
    %v1378 = vadd.f32 %v1377, 1.0
    %v1379 = vrcp.pop %v1378
    %v1380 = vmul.f32 1.0, %v1379
    %v1381 = vmul.f32 %v1380, 2.0
    %v1382 = vsub.f32 %v1381, 1.0
    %v1383 = vmul.f32 %v1380, %v1308
    %1385 = vrot.lane.b32.xlu0 %v1382, 64
    %v1386 = vpop.permute.xlu0 %1385
    %v1388 = vmul.f32 %v1380, %v1386
    %1390 = vrot.lane.b32.xlu0 %v1388, 32
    %v1391 = vpop.permute.xlu0 %1390
    %v1393 = vadd.f32 %v1383, %v1391
    %v1394 = vmul.f32 %v1393, 2.0
    %v1395 = vxor.u32 %v1394, 2147483648
    %v1396 = vmul.f32 %v1395, 1.442695
    %v1397 = vpow.pop %v1396
    %v1398 = vadd.f32 %v1397, 1.0
    %v1399 = vrcp.pop %v1398
    %v1400 = vmul.f32 1.0, %v1399
    %v1401 = vmul.f32 %v1400, 2.0
    %v1402 = vsub.f32 %v1401, 1.0
    %1404 = vrot.lane.b32.xlu0 %v1402, 64
    %v1405 = vpop.permute.xlu0 %1404
    %v1407 = vmul.f32 %v1380, %v1405
    %1409 = vrot.lane.b32.xlu0 %v1407, 32
    %v1410 = vpop.permute.xlu0 %1409
    %1412 = vst.msk [vmem:[#allocation3 + $0x20] sm:$0xff] %vm256, %v1410
    %v1413 = vpack.c.bf16 %v1407, %v1407
    %1415 = vrot.lane.b32.xlu0 %v1413, 32
    %v1416 = vpop.permute.xlu0 %1415
    %v1418 = vsel %vm256, %v1416, 0
    %1420 = vmatprep.subr.bf16.mxu0 0
    %1421 = vmatpush1.bf16.msra.mxu0 %v1073
    %1422 = vmatprep.subr.bf16.mxu0 0
    %1423 = vmatpush1.bf16.msra.mxu0 %v1074
    %1424 = vmatprep.subr.bf16.mxu0 0
    %1425 = vmatpush1.bf16.msra.mxu0 0
    %1426 = vmatprep.subr.bf16.mxu0 0
    %1427 = vmatpush1.bf16.msra.mxu0 0
    %1428 = vmatprep.subr.bf16.mxu0 0
    %1429 = vmatpush1.bf16.msra.mxu0 0
    %1430 = vmatprep.subr.bf16.mxu0 0
    %1431 = vmatpush1.bf16.msra.mxu0 0
    %1432 = vmatprep.subr.bf16.mxu0 0
    %1433 = vmatpush1.bf16.msra.mxu0 0
    %1434 = vmatprep.subr.bf16.mxu0 0
    %1435 = vmatpush1.bf16.msra.mxu0 0
    %1436 = vmatprep.subr.bf16.mxu0 0
    %1437 = vmatpush1.bf16.msra.mxu0 0
    %1438 = vmatprep.subr.bf16.mxu0 0
    %1439 = vmatpush1.bf16.msra.mxu0 0
    %1440 = vmatprep.subr.bf16.mxu0 0
    %1441 = vmatpush1.bf16.msra.mxu0 0
    %1442 = vmatprep.subr.bf16.mxu0 0
    %1443 = vmatpush1.bf16.msra.mxu0 0
    %1444 = vmatprep.subr.bf16.mxu0 0
    %1445 = vmatpush1.bf16.msra.mxu0 0
    %1446 = vmatprep.subr.bf16.mxu0 0
    %1447 = vmatpush1.bf16.msra.mxu0 0
    %1448 = vmatprep.subr.bf16.mxu0 0
    %1449 = vmatpush1.bf16.msra.mxu0 0
    %1450 = vmatprep.subr.bf16.mxu0 0
    %1451 = vmatpush1.bf16.msra.mxu0 0
    %1452 = vmatprep.mubr.bf16.mxu0 0
    %1453 = vmatmul.mubr.bf16.gmra.mrb[0].mxu0 %v1418
    %v1454 = vpop.f32.mrb[0].mxu0
    %v1455 = vadd.f32 %v83, %v1454
    %v1456 = vpop.f32.mrb[0].mxu0
    %v1457 = vpop.f32.mrb[0].mxu0
    %v1458 = vpop.f32.mrb[0].mxu0
    %1459 = vdwg.mxu0
    %v1460 = vxor.u32 %v1455, 2147483648
    %v1461 = vmul.f32 %v1460, 1.442695
    %v1462 = vpow.pop %v1461
    %v1463 = vadd.f32 %v1462, 1.0
    %v1464 = vrcp.pop %v1463
    %v1465 = vmul.f32 1.0, %v1464
    %v1466 = vmul.f32 %v1465, 2.0
    %v1467 = vsub.f32 %v1466, 1.0
    %v1468 = vmul.f32 %v1465, %v1393
    %1470 = vrot.lane.b32.xlu0 %v1467, 64
    %v1471 = vpop.permute.xlu0 %1470
    %v1473 = vmul.f32 %v1465, %v1471
    %1475 = vrot.lane.b32.xlu0 %v1473, 32
    %v1476 = vpop.permute.xlu0 %1475
    %v1478 = vadd.f32 %v1468, %v1476
    %v1479 = vmul.f32 %v1478, 2.0
    %v1480 = vxor.u32 %v1479, 2147483648
    %v1481 = vmul.f32 %v1480, 1.442695
    %v1482 = vpow.pop %v1481
    %v1483 = vadd.f32 %v1482, 1.0
    %v1484 = vrcp.pop %v1483
    %v1485 = vmul.f32 1.0, %v1484
    %v1486 = vmul.f32 %v1485, 2.0
    %v1487 = vsub.f32 %v1486, 1.0
    %1489 = vrot.lane.b32.xlu0 %v1487, 64
    %v1490 = vpop.permute.xlu0 %1489
    %v1492 = vmul.f32 %v1465, %v1490
    %1494 = vrot.lane.b32.xlu0 %v1492, 32
    %v1495 = vpop.permute.xlu0 %1494
    %1497 = vst.msk [vmem:[#allocation3 + $0x28] sm:$0xff] %vm256, %v1495
    %v1498 = vld [vmem:[#allocation3] sm:$0xff]
    %v1499 = vld [vmem:[#allocation3 + $0x8] sm:$0xff]
    %v1500 = vld [vmem:[#allocation3 + $0x10] sm:$0xff]
    %v1501 = vld [vmem:[#allocation3 + $0x18] sm:$0xff]
    %v1502 = vld [vmem:[#allocation3 + $0x20] sm:$0xff]
    %v1503 = vld [vmem:[#allocation3 + $0x28] sm:$0xff]
    %v1504 = vld [vmem:[%s9] sm:$0xff]
    %v1505 = vld [vmem:[%s9 + $0x8] sm:$0xff]
    %v1506 = vld [vmem:[%s9 + $0x10] sm:$0xff]
    %v1507 = vld [vmem:[%s9 + $0x18] sm:$0xff]
    %v1508 = vld [vmem:[%s10] sm:$0x1]
    %v1510 = vlaneseq
    %v1511 = vshrl.u32 %v1510, 7
    %v1512 = vsub.s32 0, %v1511
    %v1513 = vrot.slane %v1508, %v1512
    %v1516 = vsel %vm256, %v1498, 0
    %v1519 = vsel %vm256, %v1499, 0
    %v1522 = vsel %vm256, %v1500, 0
    %v1525 = vsel %vm256, %v1501, 0
    %v1528 = vsel %vm256, %v1502, 0
    %v1531 = vsel %vm256, %v1503, 0
    %1533 = vmatprep.subr.mxu0 0.0
    %1534 = vmatpush1.msra.mxu0 %v1504
    %1535 = vmatprep.subr.mxu0 0.0
    %1536 = vmatpush1.msra.mxu0 %v1505
    %1537 = vmatprep.subr.mxu0 0.0
    %1538 = vmatpush1.msra.mxu0 %v1506
    %1539 = vmatprep.subr.mxu0 0.0
    %1540 = vmatpush1.msra.mxu0 %v1507
    %1541 = vmatprep.subr.mxu0 0.0
    %1542 = vmatpush1.msra.mxu0 0.0
    %1543 = vmatprep.subr.mxu0 0.0
    %1544 = vmatpush1.msra.mxu0 0.0
    %1545 = vmatprep.subr.mxu0 0.0
    %1546 = vmatpush1.msra.mxu0 0.0
    %1547 = vmatprep.subr.mxu0 0.0
    %1548 = vmatpush1.msra.mxu0 0.0
    %1549 = vmatprep.subr.mxu0 0.0
    %1550 = vmatpush1.msra.mxu0 0.0
    %1551 = vmatprep.subr.mxu0 0.0
    %1552 = vmatpush1.msra.mxu0 0.0
    %1553 = vmatprep.subr.mxu0 0.0
    %1554 = vmatpush1.msra.mxu0 0.0
    %1555 = vmatprep.subr.mxu0 0.0
    %1556 = vmatpush1.msra.mxu0 0.0
    %1557 = vmatprep.subr.mxu0 0.0
    %1558 = vmatpush1.msra.mxu0 0.0
    %1559 = vmatprep.subr.mxu0 0.0
    %1560 = vmatpush1.msra.mxu0 0.0
    %1561 = vmatprep.subr.mxu0 0.0
    %1562 = vmatpush1.msra.mxu0 0.0
    %1563 = vmatprep.subr.mxu0 0.0
    %1564 = vmatpush1.msra.mxu0 0.0
    %1565 = vmatprep.subr.mxu0 0.0
    %1566 = vmatpush1.msra.mxu0 0.0
    %1567 = vmatprep.subr.mxu0 0.0
    %1568 = vmatpush1.msra.mxu0 0.0
    %1569 = vmatprep.subr.mxu0 0.0
    %1570 = vmatpush1.msra.mxu0 0.0
    %1571 = vmatprep.subr.mxu0 0.0
    %1572 = vmatpush1.msra.mxu0 0.0
    %1573 = vmatprep.subr.mxu0 0.0
    %1574 = vmatpush1.msra.mxu0 0.0
    %1575 = vmatprep.subr.mxu0 0.0
    %1576 = vmatpush1.msra.mxu0 0.0
    %1577 = vmatprep.subr.mxu0 0.0
    %1578 = vmatpush1.msra.mxu0 0.0
    %1579 = vmatprep.subr.mxu0 0.0
    %1580 = vmatpush1.msra.mxu0 0.0
    %1581 = vmatprep.subr.mxu0 0.0
    %1582 = vmatpush1.msra.mxu0 0.0
    %1583 = vmatprep.subr.mxu0 0.0
    %1584 = vmatpush1.msra.mxu0 0.0
    %1585 = vmatprep.subr.mxu0 0.0
    %1586 = vmatpush1.msra.mxu0 0.0
    %1587 = vmatprep.subr.mxu0 0.0
    %1588 = vmatpush1.msra.mxu0 0.0
    %1589 = vmatprep.subr.mxu0 0.0
    %1590 = vmatpush1.msra.mxu0 0.0
    %1591 = vmatprep.subr.mxu0 0.0
    %1592 = vmatpush1.msra.mxu0 0.0
    %1593 = vmatprep.subr.mxu0 0.0
    %1594 = vmatpush1.msra.mxu0 0.0
    %1595 = vmatprep.subr.mxu0 0.0
    %1596 = vmatpush1.msra.mxu0 0.0
    %1597 = vmatprep.mubr.f32.mxu0 0.0
    %1598 = vmatmul.mubr.f32.gmra.mrb[0].mxu0 %v1516
    %v1599 = vpop.f32.mrb[0].mxu0
    %v1600 = vadd.f32 %v1513, %v1599
    %v1601 = vpop.f32.mrb[0].mxu0
    %1602 = vmatprep.mubr.f32.mxu0 0.0
    %1603 = vmatmul.mubr.f32.gmra.mrb[0].mxu0 %v1519
    %v1604 = vpop.f32.mrb[0].mxu0
    %v1605 = vadd.f32 %v1513, %v1604
    %v1606 = vpop.f32.mrb[0].mxu0
    %1607 = vmatprep.mubr.f32.mxu0 0.0
    %1608 = vmatmul.mubr.f32.gmra.mrb[0].mxu0 %v1522
    %v1609 = vpop.f32.mrb[0].mxu0
    %v1610 = vadd.f32 %v1513, %v1609
    %v1611 = vpop.f32.mrb[0].mxu0
    %1612 = vmatprep.mubr.f32.mxu0 0.0
    %1613 = vmatmul.mubr.f32.gmra.mrb[0].mxu0 %v1525
    %v1614 = vpop.f32.mrb[0].mxu0
    %v1615 = vadd.f32 %v1513, %v1614
    %v1616 = vpop.f32.mrb[0].mxu0
    %1617 = vmatprep.mubr.f32.mxu0 0.0
    %1618 = vmatmul.mubr.f32.gmra.mrb[0].mxu0 %v1528
    %v1619 = vpop.f32.mrb[0].mxu0
    %v1620 = vadd.f32 %v1513, %v1619
    %v1621 = vpop.f32.mrb[0].mxu0
    %1622 = vmatprep.mubr.f32.mxu0 0.0
    %1623 = vmatmul.mubr.f32.gmra.mrb[0].mxu0 %v1531
    %v1624 = vpop.f32.mrb[0].mxu0
    %v1625 = vadd.f32 %v1513, %v1624
    %v1626 = vpop.f32.mrb[0].mxu0
    %1627 = vdwg.mxu0
    %1628 = vst [vmem:[#allocation9] sm:$0xff] %v1600
    %1629 = vst [vmem:[#allocation9 + $0x8] sm:$0xff] %v1605
    %1630 = vst [vmem:[#allocation9 + $0x10] sm:$0xff] %v1610
    %1631 = vst [vmem:[#allocation9 + $0x18] sm:$0xff] %v1615
    %1632 = vst [vmem:[#allocation9 + $0x20] sm:$0xff] %v1620
    %1633 = vst [vmem:[#allocation9 + $0x28] sm:$0xff] %v1625
    // Predicated region
    $region54: #{tpu_custom_call.1} parent=1 // pred_check
      _
    $region55: #{tpu_custom_call.1} parent=1 // pred_check_branch
      %1635 = sbr.rel (0) target = $region57
    $region56: #{tpu_custom_call.1} parent=1 // pred_region
      %s1637 = ssub.s32 768, 768
      %1638 = vsyncadd [#allocation6], %s1637
      %s1639 = sshll.u32 [#allocation9], 4
      %s1640 = int_to_ptr.vmem [resolvable:$true] %s1639
      %1645 = dma.vmem_to_hbm [thread:$0]  %s1640, 768, %s11, [#allocation6], 128, 128, 8
    $region57: #{tpu_custom_call.1} parent=1 // pred_fallthru
      _
    // Predicated region
    $region58: #{tpu_custom_call.1} parent=1 // pred_check
      _
    $region59: #{tpu_custom_call.1} parent=1 // pred_check_branch
      %1647 = sbr.rel (0) target = $region61
    $region60: #{tpu_custom_call.1} parent=1 // pred_region
      %1648 = dma.done [#allocation6], 768
    $region61: #{tpu_custom_call.1} parent=1 // pred_fallthru
      _
    %1649 = vsyncpa [#allocation5], 1
    %1650 = vsyncpa [#allocation8], 1
    %1651 = vsyncpa [#allocation6], 1

</llo_original>
